<compile_context>
chip_gen: v7x
topology: tpu7x:2x2x1
jax: 0.10.0
libtpu: 0.0.40
codegen_flags: <defaults>
</compile_context>

<pallas_src>
import jax
import jax.numpy as jnp
from jax.experimental import pallas as pl
from jax.experimental.pallas import tpu as pltpu


def _round_up(x, m):
    return (x + m - 1) // m * m


def _lstm_kernel(gx_ref, h0_ref, c0_ref, whh_ref, out_ref, cn_ref, h_scr, c_scr):
    """One grid step = one (batch block, time block).  Carry h/c in VMEM scratch."""
    t_blk = pl.program_id(1)
    Hp = h_scr.shape[-1]
    T_BLK = gx_ref.shape[0]

    @pl.when(t_blk == 0)
    def _():
        h_scr[...] = h0_ref[...].astype(jnp.float32)
        c_scr[...] = c0_ref[...].astype(jnp.float32)

    def step(t, carry):
        h = h_scr[...]                       # (B_BLK, Hp) f32
        c = c_scr[...]                       # (B_BLK, Hp) f32
        # gates_x was precomputed outside (input projection + fused bias).
        gates = (gx_ref[t].astype(jnp.float32)
                 + jnp.dot(h.astype(whh_ref.dtype), whh_ref[...],
                           preferred_element_type=jnp.float32))   # (B_BLK, 4Hp)
        # Gate order [i, f, g, o]; each slice is a 128-lane-aligned block.
        i_g = jax.nn.sigmoid(gates[:, 0 * Hp:1 * Hp])
        f_g = jax.nn.sigmoid(gates[:, 1 * Hp:2 * Hp])
        g_g = jnp.tanh(gates[:, 2 * Hp:3 * Hp])
        o_g = jax.nn.sigmoid(gates[:, 3 * Hp:4 * Hp])
        c_new = f_g * c + i_g * g_g
        h_new = o_g * jnp.tanh(c_new)
        h_scr[...] = h_new
        c_scr[...] = c_new
        out_ref[t] = h_new.astype(out_ref.dtype)
        return carry

    jax.lax.fori_loop(0, T_BLK, step, 0, unroll=True)

    @pl.when(t_blk == pl.num_programs(1) - 1)
    def _():
        cn_ref[...] = c_scr[...].astype(cn_ref.dtype)


def lstm_forward_pallas(x_tm, h0, c0, w_ih, w_hh, b_ih, b_hh,
                        matmul_dtype=jnp.float32):
    """x_tm: (L, B, H) time-major inputs.  h0/c0: (B, H).  Returns (out_tm, h_n, c_n)."""
    L, B, H = x_tm.shape
    out_dtype = x_tm.dtype
    if L == 0:  # guard: never run the kernel with an empty time axis
        return (jnp.zeros((0, B, H), out_dtype),
                h0.astype(out_dtype), c0.astype(out_dtype))

    Hp = _round_up(H, 128)          # lane-aligned per-gate width
    Bp = _round_up(B, 8)            # sublane-full batch
    B_BLK = 8
    T_BLK = next(d for d in (32, 16, 8, 4, 2, 1) if L % d == 0)

    # ---- Hoisted input projection: one big matmul (XLA), bias fused ----------
    wih_t = w_ih.T                                            # (H, 4H)
    bias = (b_ih + b_hh).astype(jnp.float32)                  # (4H,)
    gx = jnp.dot(x_tm.reshape(L * B, H).astype(matmul_dtype),
                 wih_t.astype(matmul_dtype),
                 preferred_element_type=jnp.float32) + bias   # (L*B, 4H) f32
    # Pad each gate H -> Hp (zeros => padded hidden columns stay exactly 0).
    gx = gx.reshape(L, B, 4, H)
    gx = jnp.pad(gx, ((0, 0), (0, Bp - B), (0, 0), (0, Hp - H)))
    gx = gx.reshape(L, Bp, 4 * Hp).astype(matmul_dtype)

    # ---- Recurrent weight, gate-blocked + padded: (Hp, 4*Hp), cols = g*Hp+out --
    whh_g = w_hh.reshape(4, H, H)                   # (gate, out, in)
    whh_g = jnp.transpose(whh_g, (2, 0, 1))         # (in, gate, out)
    whh_g = jnp.pad(whh_g, ((0, Hp - H), (0, 0), (0, Hp - H)))
    whh_t = whh_g.reshape(Hp, 4 * Hp).astype(matmul_dtype)

    h0p = jnp.pad(h0.astype(jnp.float32), ((0, Bp - B), (0, Hp - H)))
    c0p = jnp.pad(c0.astype(jnp.float32), ((0, Bp - B), (0, Hp - H)))

    # ---- VMEM budget (double-buffered blocks + resident weight + scratch) ----
    msz = jnp.dtype(matmul_dtype).itemsize
    osz = jnp.dtype(out_dtype).itemsize
    vmem_est = (2 * T_BLK * B_BLK * 4 * Hp * msz       # gates_x blocks
                + 2 * T_BLK * B_BLK * Hp * osz         # output blocks
                + 2 * Hp * 4 * Hp * msz                # W_hh^T
                + 8 * B_BLK * Hp * 4)                  # h0/c0/c_n blocks + scratch
    vmem_limit = int(min(64 * 1024 * 1024, max(4 * 1024 * 1024, 2 * vmem_est)))

    grid = (Bp // B_BLK, L // T_BLK)
    out_p, c_n_p = pl.pallas_call(
        _lstm_kernel,
        out_shape=(
            jax.ShapeDtypeStruct((L, Bp, Hp), out_dtype),
            jax.ShapeDtypeStruct((Bp, Hp), out_dtype),
        ),
        grid_spec=pltpu.PrefetchScalarGridSpec(
            num_scalar_prefetch=0,
            grid=grid,
            in_specs=[
                pl.BlockSpec((T_BLK, B_BLK, 4 * Hp), lambda b, t: (t, b, 0)),  # gates_x
                pl.BlockSpec((B_BLK, Hp), lambda b, t: (b, 0)),                # h0
                pl.BlockSpec((B_BLK, Hp), lambda b, t: (b, 0)),                # c0
                pl.BlockSpec((Hp, 4 * Hp), lambda b, t: (0, 0)),               # W_hh^T
            ],
            out_specs=[
                pl.BlockSpec((T_BLK, B_BLK, Hp), lambda b, t: (t, b, 0)),      # out seq
                pl.BlockSpec((B_BLK, Hp), lambda b, t: (b, 0)),                # c_n
            ],
            scratch_shapes=[
                pltpu.VMEM((B_BLK, Hp), jnp.float32),   # h carry
                pltpu.VMEM((B_BLK, Hp), jnp.float32),   # c carry
            ],
        ),
        compiler_params=pltpu.CompilerParams(
            dimension_semantics=("parallel", "arbitrary"),   # batch parallel, time serial
            vmem_limit_bytes=vmem_limit),
    )(gx, h0p, c0p, whh_t)

    out_tm = out_p[:, :B, :H]        # strip batch/lane padding
    h_n = out_tm[L - 1]              # h_n == last output of a single-layer LSTM
    c_n = c_n_p[:B, :H]
    return out_tm, h_n, c_n


class EncoderLSTMPallas:
    """JAX/Pallas equivalent of the PyTorch EncoderLSTM (n_layers=1, no dropout)."""

    def __init__(self, input_size, hidden_size, key, matmul_dtype=jnp.float32):
        self.hidden_size = hidden_size
        self.n_layers = 1
        self.matmul_dtype = matmul_dtype
        H = hidden_size
        k = 1.0 / jnp.sqrt(jnp.float32(H))
        keys = jax.random.split(key, 5)
        # nn.Embedding default init: N(0, 1)
        self.embedding = jax.random.normal(keys[0], (input_size, H), jnp.float32)
        # nn.LSTM default init: U(-1/sqrt(H), 1/sqrt(H)), gate order [i,f,g,o]
        self.w_ih = jax.random.uniform(keys[1], (4 * H, H), jnp.float32, -k, k)
        self.w_hh = jax.random.uniform(keys[2], (4 * H, H), jnp.float32, -k, k)
        self.b_ih = jax.random.uniform(keys[3], (4 * H,), jnp.float32, -k, k)
        self.b_hh = jax.random.uniform(keys[4], (4 * H,), jnp.float32, -k, k)

    def init_hidden(self, batch_size=1):
        H = self.hidden_size
        return (jnp.zeros((self.n_layers, batch_size, H), jnp.float32),
                jnp.zeros((self.n_layers, batch_size, H), jnp.float32))

    def __call__(self, inputs, hidden):
        # inputs: (B, L) int32 token ids; hidden: ((1,B,H), (1,B,H))
        h0, c0 = hidden
        embedded = jnp.take(self.embedding, inputs, axis=0)     # (B, L, H) -- gather glue
        x_tm = jnp.transpose(embedded, (1, 0, 2))               # (L, B, H)
        out_tm, h_n, c_n = lstm_forward_pallas(
            x_tm, h0[0], c0[0], self.w_ih, self.w_hh, self.b_ih, self.b_hh,
            matmul_dtype=self.matmul_dtype)
        output = jnp.transpose(out_tm, (1, 0, 2))               # (B, L, H)
        return output, (h_n[None], c_n[None])


def _lstm_reference(x_tm, h0, c0, w_ih, w_hh, b_ih, b_hh):
    """Pure-JAX reference (lax.scan) for correctness checking."""
    H = h0.shape[-1]

    def step(carry, x_t):
        h, c = carry
        gates = x_t @ w_ih.T + b_ih + h @ w_hh.T + b_hh
        i = jax.nn.sigmoid(gates[:, :H])
        f = jax.nn.sigmoid(gates[:, H:2 * H])
        g = jnp.tanh(gates[:, 2 * H:3 * H])
        o = jax.nn.sigmoid(gates[:, 3 * H:])
        c = f * c + i * g
        h = o * jnp.tanh(c)
        return (h, c), h

    (h_n, c_n), out = jax.lax.scan(step, (h0, c0), x_tm)
    return out, h_n, c_n


if __name__ == "__main__":
    key = jax.random.PRNGKey(0)
    vocab_size, hidden_size = 16, 32
    batch, seq_len = 2, 8

    k_model, k_tok = jax.random.split(key)
    model = EncoderLSTMPallas(vocab_size, hidden_size, k_model)

    tokens = jax.random.randint(k_tok, (batch, seq_len), 0, vocab_size, jnp.int32)
    hidden = model.init_hidden(batch)

    output, (h_n, c_n) = model(tokens, hidden)
    jax.block_until_ready((output, h_n, c_n))

    # Pure-JAX LSTM reference.
    emb = jnp.take(model.embedding, tokens, axis=0)
    x_tm = jnp.transpose(emb, (1, 0, 2))
    ref_out, ref_h, ref_c = _lstm_reference(
        x_tm, hidden[0][0], hidden[1][0],
        model.w_ih, model.w_hh, model.b_ih, model.b_hh)
    ref_out_bf = jnp.transpose(ref_out, (1, 0, 2))

    assert output.shape == (batch, seq_len, hidden_size)
    assert h_n.shape == (1, batch, hidden_size)
    assert c_n.shape == (1, batch, hidden_size)
    assert jnp.allclose(output, ref_out_bf, atol=1e-4, rtol=1e-4)
    assert jnp.allclose(h_n[0], ref_h, atol=1e-4, rtol=1e-4)
    assert jnp.allclose(c_n[0], ref_c, atol=1e-4, rtol=1e-4)

    # bf16-matmul-operand variant (v6e/v7x fast path); f32 carry + f32 elementwise.
    out_bf, hn_bf, cn_bf = lstm_forward_pallas(
        x_tm, hidden[0][0], hidden[1][0],
        model.w_ih, model.w_hh, model.b_ih, model.b_hh,
        matmul_dtype=jnp.bfloat16)
    jax.block_until_ready((out_bf, hn_bf, cn_bf))
    assert jnp.allclose(out_bf, ref_out, atol=1e-1, rtol=1e-1)
    assert jnp.allclose(cn_bf, ref_c, atol=1e-1, rtol=1e-1)

    print("KERNEL_OK")
</pallas_src>

<mosaic_0001>
module attributes {stable_mosaic.version = 11 : i64} {
  func.func @_lstm_kernel(%arg0: i32, %arg1: i32, %arg2: memref<8x8x512xf32, #tpu.memory_space<vmem>>, %arg3: memref<8x128xf32, #tpu.memory_space<vmem>>, %arg4: memref<8x128xf32, #tpu.memory_space<vmem>>, %arg5: memref<128x512xf32, #tpu.memory_space<vmem>>, %arg6: memref<8x8x128xf32, #tpu.memory_space<vmem>>, %arg7: memref<8x128xf32, #tpu.memory_space<vmem>>, %arg8: memref<8x128xf32, #tpu.memory_space<vmem>>, %arg9: memref<8x128xf32, #tpu.memory_space<vmem>>) attributes {dimension_semantics = [#tpu.dimension_semantics<parallel>, #tpu.dimension_semantics<arbitrary>], iteration_bounds = array<i64: 1, 1>, scalar_prefetch = 0 : i64, scratch_operands = 2 : i64, tpu.core_type = #tpu.core_type<tc>, window_params = [{transform_indices = @transform_0, window_bounds = array<i64: 8, 8, 512>}, {transform_indices = @transform_1, window_bounds = array<i64: 8, 128>}, {transform_indices = @transform_2, window_bounds = array<i64: 8, 128>}, {pipeline_mode = #tpu.pipeline_mode<synchronous>, transform_indices = @transform_3, window_bounds = array<i64: 128, 512>}, {transform_indices = @transform_4, window_bounds = array<i64: 8, 8, 128>}, {transform_indices = @transform_5, window_bounds = array<i64: 8, 128>}]} {
    %c0_i32 = arith.constant 0 : i32
    %0 = arith.cmpi eq, %arg1, %c0_i32 : i32
    %1 = arith.extui %0 : i1 to i32
    %c0_i32_0 = arith.constant 0 : i32
    %2 = arith.cmpi ne, %1, %c0_i32_0 : i32
    scf.if %2 {
      %c0_146 = arith.constant 0 : index
      %c0_147 = arith.constant 0 : index
      %318 = vector.load %arg3[%c0_146, %c0_147] : memref<8x128xf32, #tpu.memory_space<vmem>>, vector<8x128xf32>
      %c0_148 = arith.constant 0 : index
      %c0_149 = arith.constant 0 : index
      %319 = vector.load %arg8[%c0_148, %c0_149] : memref<8x128xf32, #tpu.memory_space<vmem>>, vector<8x128xf32>
      tpu.vector_store %arg8[%c0_148, %c0_149], %318 {strides = array<i32>} : memref<8x128xf32, #tpu.memory_space<vmem>>, vector<8x128xf32>,
      %c0_150 = arith.constant 0 : index
      %c0_151 = arith.constant 0 : index
      %320 = vector.load %arg4[%c0_150, %c0_151] : memref<8x128xf32, #tpu.memory_space<vmem>>, vector<8x128xf32>
      %c0_152 = arith.constant 0 : index
      %c0_153 = arith.constant 0 : index
      %321 = vector.load %arg9[%c0_152, %c0_153] : memref<8x128xf32, #tpu.memory_space<vmem>>, vector<8x128xf32>
      tpu.vector_store %arg9[%c0_152, %c0_153], %320 {strides = array<i32>} : memref<8x128xf32, #tpu.memory_space<vmem>>, vector<8x128xf32>,
    } else {
    }
    %c0_i32_1 = arith.constant 0 : i32
    %c0 = arith.constant 0 : index
    %c0_2 = arith.constant 0 : index
    %3 = vector.load %arg8[%c0, %c0_2] : memref<8x128xf32, #tpu.memory_space<vmem>>, vector<8x128xf32>
    %c0_3 = arith.constant 0 : index
    %c0_4 = arith.constant 0 : index
    %4 = vector.load %arg9[%c0_3, %c0_4] : memref<8x128xf32, #tpu.memory_space<vmem>>, vector<8x128xf32>
    %5 = arith.index_cast %c0_i32_1 : i32 to index
    %c0_5 = arith.constant 0 : index
    %c0_6 = arith.constant 0 : index
    %6 = vector.load %arg2[%5, %c0_5, %c0_6] : memref<8x8x512xf32, #tpu.memory_space<vmem>>, vector<1x8x512xf32>
    %7 = vector.shape_cast %6 : vector<1x8x512xf32> to vector<8x512xf32>
    %c0_7 = arith.constant 0 : index
    %c0_8 = arith.constant 0 : index
    %8 = vector.load %arg5[%c0_7, %c0_8] : memref<128x512xf32, #tpu.memory_space<vmem>>, vector<128x512xf32>
    %cst = arith.constant dense<0.000000e+00> : vector<8x512xf32>
    %9 = tpu.matmul %3, %8, %cst {dimension_numbers = #tpu.dot_dimension_numbers<[1], [0], [0], [1], [0, 0, 1, 1], [], []>} : vector<8x128xf32>, vector<128x512xf32>, vector<8x512xf32> -> vector<8x512xf32>
    %10 = arith.addf %7, %9 : vector<8x512xf32>
    %11 = vector.extract_strided_slice %10 {offsets = [0, 0], sizes = [8, 128], strides = [1, 1]} : vector<8x512xf32> to vector<8x128xf32>
    %12 = arith.negf %11 : vector<8x128xf32>
    %13 = math.exp %12 : vector<8x128xf32>
    %cst_9 = arith.constant 1.000000e+00 : f32
    %14 = vector.broadcast %cst_9 : f32 to vector<8x128xf32>
    %15 = arith.addf %14, %13 : vector<8x128xf32>
    %16 = arith.divf %14, %15 : vector<8x128xf32>
    %17 = vector.extract_strided_slice %10 {offsets = [0, 128], sizes = [8, 128], strides = [1, 1]} : vector<8x512xf32> to vector<8x128xf32>
    %18 = arith.negf %17 : vector<8x128xf32>
    %19 = math.exp %18 : vector<8x128xf32>
    %cst_10 = arith.constant 1.000000e+00 : f32
    %20 = vector.broadcast %cst_10 : f32 to vector<8x128xf32>
    %21 = arith.addf %20, %19 : vector<8x128xf32>
    %22 = arith.divf %20, %21 : vector<8x128xf32>
    %23 = vector.extract_strided_slice %10 {offsets = [0, 256], sizes = [8, 128], strides = [1, 1]} : vector<8x512xf32> to vector<8x128xf32>
    %24 = math.tanh %23 : vector<8x128xf32>
    %25 = vector.extract_strided_slice %10 {offsets = [0, 384], sizes = [8, 128], strides = [1, 1]} : vector<8x512xf32> to vector<8x128xf32>
    %26 = arith.negf %25 : vector<8x128xf32>
    %27 = math.exp %26 : vector<8x128xf32>
    %cst_11 = arith.constant 1.000000e+00 : f32
    %28 = vector.broadcast %cst_11 : f32 to vector<8x128xf32>
    %29 = arith.addf %28, %27 : vector<8x128xf32>
    %30 = arith.divf %28, %29 : vector<8x128xf32>
    %31 = arith.mulf %22, %4 : vector<8x128xf32>
    %32 = arith.mulf %16, %24 : vector<8x128xf32>
    %33 = arith.addf %31, %32 : vector<8x128xf32>
    %34 = math.tanh %33 : vector<8x128xf32>
    %35 = arith.mulf %30, %34 : vector<8x128xf32>
    %c0_12 = arith.constant 0 : index
    %c0_13 = arith.constant 0 : index
    %36 = vector.load %arg8[%c0_12, %c0_13] : memref<8x128xf32, #tpu.memory_space<vmem>>, vector<8x128xf32>
    tpu.vector_store %arg8[%c0_12, %c0_13], %35 {strides = array<i32>} : memref<8x128xf32, #tpu.memory_space<vmem>>, vector<8x128xf32>,
    %c0_14 = arith.constant 0 : index
    %c0_15 = arith.constant 0 : index
    %37 = vector.load %arg9[%c0_14, %c0_15] : memref<8x128xf32, #tpu.memory_space<vmem>>, vector<8x128xf32>
    tpu.vector_store %arg9[%c0_14, %c0_15], %33 {strides = array<i32>} : memref<8x128xf32, #tpu.memory_space<vmem>>, vector<8x128xf32>,
    %38 = arith.index_cast %c0_i32_1 : i32 to index
    %c0_16 = arith.constant 0 : index
    %c0_17 = arith.constant 0 : index
    %39 = vector.load %arg6[%38, %c0_16, %c0_17] : memref<8x8x128xf32, #tpu.memory_space<vmem>>, vector<1x8x128xf32>
    %40 = vector.shape_cast %39 : vector<1x8x128xf32> to vector<8x128xf32>
    %41 = vector.shape_cast %35 : vector<8x128xf32> to vector<1x8x128xf32>
    tpu.vector_store %arg6[%38, %c0_16, %c0_17], %41 {strides = array<i32>} : memref<8x8x128xf32, #tpu.memory_space<vmem>>, vector<1x8x128xf32>,
    %c1_i32 = arith.constant 1 : i32
    %c0_18 = arith.constant 0 : index
    %c0_19 = arith.constant 0 : index
    %42 = vector.load %arg8[%c0_18, %c0_19] : memref<8x128xf32, #tpu.memory_space<vmem>>, vector<8x128xf32>
    %c0_20 = arith.constant 0 : index
    %c0_21 = arith.constant 0 : index
    %43 = vector.load %arg9[%c0_20, %c0_21] : memref<8x128xf32, #tpu.memory_space<vmem>>, vector<8x128xf32>
    %44 = arith.index_cast %c1_i32 : i32 to index
    %c0_22 = arith.constant 0 : index
    %c0_23 = arith.constant 0 : index
    %45 = vector.load %arg2[%44, %c0_22, %c0_23] : memref<8x8x512xf32, #tpu.memory_space<vmem>>, vector<1x8x512xf32>
    %46 = vector.shape_cast %45 : vector<1x8x512xf32> to vector<8x512xf32>
    %c0_24 = arith.constant 0 : index
    %c0_25 = arith.constant 0 : index
    %47 = vector.load %arg5[%c0_24, %c0_25] : memref<128x512xf32, #tpu.memory_space<vmem>>, vector<128x512xf32>
    %cst_26 = arith.constant dense<0.000000e+00> : vector<8x512xf32>
    %48 = tpu.matmul %42, %47, %cst_26 {dimension_numbers = #tpu.dot_dimension_numbers<[1], [0], [0], [1], [0, 0, 1, 1], [], []>} : vector<8x128xf32>, vector<128x512xf32>, vector<8x512xf32> -> vector<8x512xf32>
    %49 = arith.addf %46, %48 : vector<8x512xf32>
    %50 = vector.extract_strided_slice %49 {offsets = [0, 0], sizes = [8, 128], strides = [1, 1]} : vector<8x512xf32> to vector<8x128xf32>
    %51 = arith.negf %50 : vector<8x128xf32>
    %52 = math.exp %51 : vector<8x128xf32>
    %cst_27 = arith.constant 1.000000e+00 : f32
    %53 = vector.broadcast %cst_27 : f32 to vector<8x128xf32>
    %54 = arith.addf %53, %52 : vector<8x128xf32>
    %55 = arith.divf %53, %54 : vector<8x128xf32>
    %56 = vector.extract_strided_slice %49 {offsets = [0, 128], sizes = [8, 128], strides = [1, 1]} : vector<8x512xf32> to vector<8x128xf32>
    %57 = arith.negf %56 : vector<8x128xf32>
    %58 = math.exp %57 : vector<8x128xf32>
    %cst_28 = arith.constant 1.000000e+00 : f32
    %59 = vector.broadcast %cst_28 : f32 to vector<8x128xf32>
    %60 = arith.addf %59, %58 : vector<8x128xf32>
    %61 = arith.divf %59, %60 : vector<8x128xf32>
    %62 = vector.extract_strided_slice %49 {offsets = [0, 256], sizes = [8, 128], strides = [1, 1]} : vector<8x512xf32> to vector<8x128xf32>
    %63 = math.tanh %62 : vector<8x128xf32>
    %64 = vector.extract_strided_slice %49 {offsets = [0, 384], sizes = [8, 128], strides = [1, 1]} : vector<8x512xf32> to vector<8x128xf32>
    %65 = arith.negf %64 : vector<8x128xf32>
    %66 = math.exp %65 : vector<8x128xf32>
    %cst_29 = arith.constant 1.000000e+00 : f32
    %67 = vector.broadcast %cst_29 : f32 to vector<8x128xf32>
    %68 = arith.addf %67, %66 : vector<8x128xf32>
    %69 = arith.divf %67, %68 : vector<8x128xf32>
    %70 = arith.mulf %61, %43 : vector<8x128xf32>
    %71 = arith.mulf %55, %63 : vector<8x128xf32>
    %72 = arith.addf %70, %71 : vector<8x128xf32>
    %73 = math.tanh %72 : vector<8x128xf32>
    %74 = arith.mulf %69, %73 : vector<8x128xf32>
    %c0_30 = arith.constant 0 : index
    %c0_31 = arith.constant 0 : index
    %75 = vector.load %arg8[%c0_30, %c0_31] : memref<8x128xf32, #tpu.memory_space<vmem>>, vector<8x128xf32>
    tpu.vector_store %arg8[%c0_30, %c0_31], %74 {strides = array<i32>} : memref<8x128xf32, #tpu.memory_space<vmem>>, vector<8x128xf32>,
    %c0_32 = arith.constant 0 : index
    %c0_33 = arith.constant 0 : index
    %76 = vector.load %arg9[%c0_32, %c0_33] : memref<8x128xf32, #tpu.memory_space<vmem>>, vector<8x128xf32>
    tpu.vector_store %arg9[%c0_32, %c0_33], %72 {strides = array<i32>} : memref<8x128xf32, #tpu.memory_space<vmem>>, vector<8x128xf32>,
    %77 = arith.index_cast %c1_i32 : i32 to index
    %c0_34 = arith.constant 0 : index
    %c0_35 = arith.constant 0 : index
    %78 = vector.load %arg6[%77, %c0_34, %c0_35] : memref<8x8x128xf32, #tpu.memory_space<vmem>>, vector<1x8x128xf32>
    %79 = vector.shape_cast %78 : vector<1x8x128xf32> to vector<8x128xf32>
    %80 = vector.shape_cast %74 : vector<8x128xf32> to vector<1x8x128xf32>
    tpu.vector_store %arg6[%77, %c0_34, %c0_35], %80 {strides = array<i32>} : memref<8x8x128xf32, #tpu.memory_space<vmem>>, vector<1x8x128xf32>,
    %c2_i32 = arith.constant 2 : i32
    %c0_36 = arith.constant 0 : index
    %c0_37 = arith.constant 0 : index
    %81 = vector.load %arg8[%c0_36, %c0_37] : memref<8x128xf32, #tpu.memory_space<vmem>>, vector<8x128xf32>
    %c0_38 = arith.constant 0 : index
    %c0_39 = arith.constant 0 : index
    %82 = vector.load %arg9[%c0_38, %c0_39] : memref<8x128xf32, #tpu.memory_space<vmem>>, vector<8x128xf32>
    %83 = arith.index_cast %c2_i32 : i32 to index
    %c0_40 = arith.constant 0 : index
    %c0_41 = arith.constant 0 : index
    %84 = vector.load %arg2[%83, %c0_40, %c0_41] : memref<8x8x512xf32, #tpu.memory_space<vmem>>, vector<1x8x512xf32>
    %85 = vector.shape_cast %84 : vector<1x8x512xf32> to vector<8x512xf32>
    %c0_42 = arith.constant 0 : index
    %c0_43 = arith.constant 0 : index
    %86 = vector.load %arg5[%c0_42, %c0_43] : memref<128x512xf32, #tpu.memory_space<vmem>>, vector<128x512xf32>
    %cst_44 = arith.constant dense<0.000000e+00> : vector<8x512xf32>
    %87 = tpu.matmul %81, %86, %cst_44 {dimension_numbers = #tpu.dot_dimension_numbers<[1], [0], [0], [1], [0, 0, 1, 1], [], []>} : vector<8x128xf32>, vector<128x512xf32>, vector<8x512xf32> -> vector<8x512xf32>
    %88 = arith.addf %85, %87 : vector<8x512xf32>
    %89 = vector.extract_strided_slice %88 {offsets = [0, 0], sizes = [8, 128], strides = [1, 1]} : vector<8x512xf32> to vector<8x128xf32>
    %90 = arith.negf %89 : vector<8x128xf32>
    %91 = math.exp %90 : vector<8x128xf32>
    %cst_45 = arith.constant 1.000000e+00 : f32
    %92 = vector.broadcast %cst_45 : f32 to vector<8x128xf32>
    %93 = arith.addf %92, %91 : vector<8x128xf32>
    %94 = arith.divf %92, %93 : vector<8x128xf32>
    %95 = vector.extract_strided_slice %88 {offsets = [0, 128], sizes = [8, 128], strides = [1, 1]} : vector<8x512xf32> to vector<8x128xf32>
    %96 = arith.negf %95 : vector<8x128xf32>
    %97 = math.exp %96 : vector<8x128xf32>
    %cst_46 = arith.constant 1.000000e+00 : f32
    %98 = vector.broadcast %cst_46 : f32 to vector<8x128xf32>
    %99 = arith.addf %98, %97 : vector<8x128xf32>
    %100 = arith.divf %98, %99 : vector<8x128xf32>
    %101 = vector.extract_strided_slice %88 {offsets = [0, 256], sizes = [8, 128], strides = [1, 1]} : vector<8x512xf32> to vector<8x128xf32>
    %102 = math.tanh %101 : vector<8x128xf32>
    %103 = vector.extract_strided_slice %88 {offsets = [0, 384], sizes = [8, 128], strides = [1, 1]} : vector<8x512xf32> to vector<8x128xf32>
    %104 = arith.negf %103 : vector<8x128xf32>
    %105 = math.exp %104 : vector<8x128xf32>
    %cst_47 = arith.constant 1.000000e+00 : f32
    %106 = vector.broadcast %cst_47 : f32 to vector<8x128xf32>
    %107 = arith.addf %106, %105 : vector<8x128xf32>
    %108 = arith.divf %106, %107 : vector<8x128xf32>
    %109 = arith.mulf %100, %82 : vector<8x128xf32>
    %110 = arith.mulf %94, %102 : vector<8x128xf32>
    %111 = arith.addf %109, %110 : vector<8x128xf32>
    %112 = math.tanh %111 : vector<8x128xf32>
    %113 = arith.mulf %108, %112 : vector<8x128xf32>
    %c0_48 = arith.constant 0 : index
    %c0_49 = arith.constant 0 : index
    %114 = vector.load %arg8[%c0_48, %c0_49] : memref<8x128xf32, #tpu.memory_space<vmem>>, vector<8x128xf32>
    tpu.vector_store %arg8[%c0_48, %c0_49], %113 {strides = array<i32>} : memref<8x128xf32, #tpu.memory_space<vmem>>, vector<8x128xf32>,
    %c0_50 = arith.constant 0 : index
    %c0_51 = arith.constant 0 : index
    %115 = vector.load %arg9[%c0_50, %c0_51] : memref<8x128xf32, #tpu.memory_space<vmem>>, vector<8x128xf32>
    tpu.vector_store %arg9[%c0_50, %c0_51], %111 {strides = array<i32>} : memref<8x128xf32, #tpu.memory_space<vmem>>, vector<8x128xf32>,
    %116 = arith.index_cast %c2_i32 : i32 to index
    %c0_52 = arith.constant 0 : index
    %c0_53 = arith.constant 0 : index
    %117 = vector.load %arg6[%116, %c0_52, %c0_53] : memref<8x8x128xf32, #tpu.memory_space<vmem>>, vector<1x8x128xf32>
    %118 = vector.shape_cast %117 : vector<1x8x128xf32> to vector<8x128xf32>
    %119 = vector.shape_cast %113 : vector<8x128xf32> to vector<1x8x128xf32>
    tpu.vector_store %arg6[%116, %c0_52, %c0_53], %119 {strides = array<i32>} : memref<8x8x128xf32, #tpu.memory_space<vmem>>, vector<1x8x128xf32>,
    %c3_i32 = arith.constant 3 : i32
    %c0_54 = arith.constant 0 : index
    %c0_55 = arith.constant 0 : index
    %120 = vector.load %arg8[%c0_54, %c0_55] : memref<8x128xf32, #tpu.memory_space<vmem>>, vector<8x128xf32>
    %c0_56 = arith.constant 0 : index
    %c0_57 = arith.constant 0 : index
    %121 = vector.load %arg9[%c0_56, %c0_57] : memref<8x128xf32, #tpu.memory_space<vmem>>, vector<8x128xf32>
    %122 = arith.index_cast %c3_i32 : i32 to index
    %c0_58 = arith.constant 0 : index
    %c0_59 = arith.constant 0 : index
    %123 = vector.load %arg2[%122, %c0_58, %c0_59] : memref<8x8x512xf32, #tpu.memory_space<vmem>>, vector<1x8x512xf32>
    %124 = vector.shape_cast %123 : vector<1x8x512xf32> to vector<8x512xf32>
    %c0_60 = arith.constant 0 : index
    %c0_61 = arith.constant 0 : index
    %125 = vector.load %arg5[%c0_60, %c0_61] : memref<128x512xf32, #tpu.memory_space<vmem>>, vector<128x512xf32>
    %cst_62 = arith.constant dense<0.000000e+00> : vector<8x512xf32>
    %126 = tpu.matmul %120, %125, %cst_62 {dimension_numbers = #tpu.dot_dimension_numbers<[1], [0], [0], [1], [0, 0, 1, 1], [], []>} : vector<8x128xf32>, vector<128x512xf32>, vector<8x512xf32> -> vector<8x512xf32>
    %127 = arith.addf %124, %126 : vector<8x512xf32>
    %128 = vector.extract_strided_slice %127 {offsets = [0, 0], sizes = [8, 128], strides = [1, 1]} : vector<8x512xf32> to vector<8x128xf32>
    %129 = arith.negf %128 : vector<8x128xf32>
    %130 = math.exp %129 : vector<8x128xf32>
    %cst_63 = arith.constant 1.000000e+00 : f32
    %131 = vector.broadcast %cst_63 : f32 to vector<8x128xf32>
    %132 = arith.addf %131, %130 : vector<8x128xf32>
    %133 = arith.divf %131, %132 : vector<8x128xf32>
    %134 = vector.extract_strided_slice %127 {offsets = [0, 128], sizes = [8, 128], strides = [1, 1]} : vector<8x512xf32> to vector<8x128xf32>
    %135 = arith.negf %134 : vector<8x128xf32>
    %136 = math.exp %135 : vector<8x128xf32>
    %cst_64 = arith.constant 1.000000e+00 : f32
    %137 = vector.broadcast %cst_64 : f32 to vector<8x128xf32>
    %138 = arith.addf %137, %136 : vector<8x128xf32>
    %139 = arith.divf %137, %138 : vector<8x128xf32>
    %140 = vector.extract_strided_slice %127 {offsets = [0, 256], sizes = [8, 128], strides = [1, 1]} : vector<8x512xf32> to vector<8x128xf32>
    %141 = math.tanh %140 : vector<8x128xf32>
    %142 = vector.extract_strided_slice %127 {offsets = [0, 384], sizes = [8, 128], strides = [1, 1]} : vector<8x512xf32> to vector<8x128xf32>
    %143 = arith.negf %142 : vector<8x128xf32>
    %144 = math.exp %143 : vector<8x128xf32>
    %cst_65 = arith.constant 1.000000e+00 : f32
    %145 = vector.broadcast %cst_65 : f32 to vector<8x128xf32>
    %146 = arith.addf %145, %144 : vector<8x128xf32>
    %147 = arith.divf %145, %146 : vector<8x128xf32>
    %148 = arith.mulf %139, %121 : vector<8x128xf32>
    %149 = arith.mulf %133, %141 : vector<8x128xf32>
    %150 = arith.addf %148, %149 : vector<8x128xf32>
    %151 = math.tanh %150 : vector<8x128xf32>
    %152 = arith.mulf %147, %151 : vector<8x128xf32>
    %c0_66 = arith.constant 0 : index
    %c0_67 = arith.constant 0 : index
    %153 = vector.load %arg8[%c0_66, %c0_67] : memref<8x128xf32, #tpu.memory_space<vmem>>, vector<8x128xf32>
    tpu.vector_store %arg8[%c0_66, %c0_67], %152 {strides = array<i32>} : memref<8x128xf32, #tpu.memory_space<vmem>>, vector<8x128xf32>,
    %c0_68 = arith.constant 0 : index
    %c0_69 = arith.constant 0 : index
    %154 = vector.load %arg9[%c0_68, %c0_69] : memref<8x128xf32, #tpu.memory_space<vmem>>, vector<8x128xf32>
    tpu.vector_store %arg9[%c0_68, %c0_69], %150 {strides = array<i32>} : memref<8x128xf32, #tpu.memory_space<vmem>>, vector<8x128xf32>,
    %155 = arith.index_cast %c3_i32 : i32 to index
    %c0_70 = arith.constant 0 : index
    %c0_71 = arith.constant 0 : index
    %156 = vector.load %arg6[%155, %c0_70, %c0_71] : memref<8x8x128xf32, #tpu.memory_space<vmem>>, vector<1x8x128xf32>
    %157 = vector.shape_cast %156 : vector<1x8x128xf32> to vector<8x128xf32>
    %158 = vector.shape_cast %152 : vector<8x128xf32> to vector<1x8x128xf32>
    tpu.vector_store %arg6[%155, %c0_70, %c0_71], %158 {strides = array<i32>} : memref<8x8x128xf32, #tpu.memory_space<vmem>>, vector<1x8x128xf32>,
    %c4_i32 = arith.constant 4 : i32
    %c0_72 = arith.constant 0 : index
    %c0_73 = arith.constant 0 : index
    %159 = vector.load %arg8[%c0_72, %c0_73] : memref<8x128xf32, #tpu.memory_space<vmem>>, vector<8x128xf32>
    %c0_74 = arith.constant 0 : index
    %c0_75 = arith.constant 0 : index
    %160 = vector.load %arg9[%c0_74, %c0_75] : memref<8x128xf32, #tpu.memory_space<vmem>>, vector<8x128xf32>
    %161 = arith.index_cast %c4_i32 : i32 to index
    %c0_76 = arith.constant 0 : index
    %c0_77 = arith.constant 0 : index
    %162 = vector.load %arg2[%161, %c0_76, %c0_77] : memref<8x8x512xf32, #tpu.memory_space<vmem>>, vector<1x8x512xf32>
    %163 = vector.shape_cast %162 : vector<1x8x512xf32> to vector<8x512xf32>
    %c0_78 = arith.constant 0 : index
    %c0_79 = arith.constant 0 : index
    %164 = vector.load %arg5[%c0_78, %c0_79] : memref<128x512xf32, #tpu.memory_space<vmem>>, vector<128x512xf32>
    %cst_80 = arith.constant dense<0.000000e+00> : vector<8x512xf32>
    %165 = tpu.matmul %159, %164, %cst_80 {dimension_numbers = #tpu.dot_dimension_numbers<[1], [0], [0], [1], [0, 0, 1, 1], [], []>} : vector<8x128xf32>, vector<128x512xf32>, vector<8x512xf32> -> vector<8x512xf32>
    %166 = arith.addf %163, %165 : vector<8x512xf32>
    %167 = vector.extract_strided_slice %166 {offsets = [0, 0], sizes = [8, 128], strides = [1, 1]} : vector<8x512xf32> to vector<8x128xf32>
    %168 = arith.negf %167 : vector<8x128xf32>
    %169 = math.exp %168 : vector<8x128xf32>
    %cst_81 = arith.constant 1.000000e+00 : f32
    %170 = vector.broadcast %cst_81 : f32 to vector<8x128xf32>
    %171 = arith.addf %170, %169 : vector<8x128xf32>
    %172 = arith.divf %170, %171 : vector<8x128xf32>
    %173 = vector.extract_strided_slice %166 {offsets = [0, 128], sizes = [8, 128], strides = [1, 1]} : vector<8x512xf32> to vector<8x128xf32>
    %174 = arith.negf %173 : vector<8x128xf32>
    %175 = math.exp %174 : vector<8x128xf32>
    %cst_82 = arith.constant 1.000000e+00 : f32
    %176 = vector.broadcast %cst_82 : f32 to vector<8x128xf32>
    %177 = arith.addf %176, %175 : vector<8x128xf32>
    %178 = arith.divf %176, %177 : vector<8x128xf32>
    %179 = vector.extract_strided_slice %166 {offsets = [0, 256], sizes = [8, 128], strides = [1, 1]} : vector<8x512xf32> to vector<8x128xf32>
    %180 = math.tanh %179 : vector<8x128xf32>
    %181 = vector.extract_strided_slice %166 {offsets = [0, 384], sizes = [8, 128], strides = [1, 1]} : vector<8x512xf32> to vector<8x128xf32>
    %182 = arith.negf %181 : vector<8x128xf32>
    %183 = math.exp %182 : vector<8x128xf32>
    %cst_83 = arith.constant 1.000000e+00 : f32
    %184 = vector.broadcast %cst_83 : f32 to vector<8x128xf32>
    %185 = arith.addf %184, %183 : vector<8x128xf32>
    %186 = arith.divf %184, %185 : vector<8x128xf32>
    %187 = arith.mulf %178, %160 : vector<8x128xf32>
    %188 = arith.mulf %172, %180 : vector<8x128xf32>
    %189 = arith.addf %187, %188 : vector<8x128xf32>
    %190 = math.tanh %189 : vector<8x128xf32>
    %191 = arith.mulf %186, %190 : vector<8x128xf32>
    %c0_84 = arith.constant 0 : index
    %c0_85 = arith.constant 0 : index
    %192 = vector.load %arg8[%c0_84, %c0_85] : memref<8x128xf32, #tpu.memory_space<vmem>>, vector<8x128xf32>
    tpu.vector_store %arg8[%c0_84, %c0_85], %191 {strides = array<i32>} : memref<8x128xf32, #tpu.memory_space<vmem>>, vector<8x128xf32>,
    %c0_86 = arith.constant 0 : index
    %c0_87 = arith.constant 0 : index
    %193 = vector.load %arg9[%c0_86, %c0_87] : memref<8x128xf32, #tpu.memory_space<vmem>>, vector<8x128xf32>
    tpu.vector_store %arg9[%c0_86, %c0_87], %189 {strides = array<i32>} : memref<8x128xf32, #tpu.memory_space<vmem>>, vector<8x128xf32>,
    %194 = arith.index_cast %c4_i32 : i32 to index
    %c0_88 = arith.constant 0 : index
    %c0_89 = arith.constant 0 : index
    %195 = vector.load %arg6[%194, %c0_88, %c0_89] : memref<8x8x128xf32, #tpu.memory_space<vmem>>, vector<1x8x128xf32>
    %196 = vector.shape_cast %195 : vector<1x8x128xf32> to vector<8x128xf32>
    %197 = vector.shape_cast %191 : vector<8x128xf32> to vector<1x8x128xf32>
    tpu.vector_store %arg6[%194, %c0_88, %c0_89], %197 {strides = array<i32>} : memref<8x8x128xf32, #tpu.memory_space<vmem>>, vector<1x8x128xf32>,
    %c5_i32 = arith.constant 5 : i32
    %c0_90 = arith.constant 0 : index
    %c0_91 = arith.constant 0 : index
    %198 = vector.load %arg8[%c0_90, %c0_91] : memref<8x128xf32, #tpu.memory_space<vmem>>, vector<8x128xf32>
    %c0_92 = arith.constant 0 : index
    %c0_93 = arith.constant 0 : index
    %199 = vector.load %arg9[%c0_92, %c0_93] : memref<8x128xf32, #tpu.memory_space<vmem>>, vector<8x128xf32>
    %200 = arith.index_cast %c5_i32 : i32 to index
    %c0_94 = arith.constant 0 : index
    %c0_95 = arith.constant 0 : index
    %201 = vector.load %arg2[%200, %c0_94, %c0_95] : memref<8x8x512xf32, #tpu.memory_space<vmem>>, vector<1x8x512xf32>
    %202 = vector.shape_cast %201 : vector<1x8x512xf32> to vector<8x512xf32>
    %c0_96 = arith.constant 0 : index
    %c0_97 = arith.constant 0 : index
    %203 = vector.load %arg5[%c0_96, %c0_97] : memref<128x512xf32, #tpu.memory_space<vmem>>, vector<128x512xf32>
    %cst_98 = arith.constant dense<0.000000e+00> : vector<8x512xf32>
    %204 = tpu.matmul %198, %203, %cst_98 {dimension_numbers = #tpu.dot_dimension_numbers<[1], [0], [0], [1], [0, 0, 1, 1], [], []>} : vector<8x128xf32>, vector<128x512xf32>, vector<8x512xf32> -> vector<8x512xf32>
    %205 = arith.addf %202, %204 : vector<8x512xf32>
    %206 = vector.extract_strided_slice %205 {offsets = [0, 0], sizes = [8, 128], strides = [1, 1]} : vector<8x512xf32> to vector<8x128xf32>
    %207 = arith.negf %206 : vector<8x128xf32>
    %208 = math.exp %207 : vector<8x128xf32>
    %cst_99 = arith.constant 1.000000e+00 : f32
    %209 = vector.broadcast %cst_99 : f32 to vector<8x128xf32>
    %210 = arith.addf %209, %208 : vector<8x128xf32>
    %211 = arith.divf %209, %210 : vector<8x128xf32>
    %212 = vector.extract_strided_slice %205 {offsets = [0, 128], sizes = [8, 128], strides = [1, 1]} : vector<8x512xf32> to vector<8x128xf32>
    %213 = arith.negf %212 : vector<8x128xf32>
    %214 = math.exp %213 : vector<8x128xf32>
    %cst_100 = arith.constant 1.000000e+00 : f32
    %215 = vector.broadcast %cst_100 : f32 to vector<8x128xf32>
    %216 = arith.addf %215, %214 : vector<8x128xf32>
    %217 = arith.divf %215, %216 : vector<8x128xf32>
    %218 = vector.extract_strided_slice %205 {offsets = [0, 256], sizes = [8, 128], strides = [1, 1]} : vector<8x512xf32> to vector<8x128xf32>
    %219 = math.tanh %218 : vector<8x128xf32>
    %220 = vector.extract_strided_slice %205 {offsets = [0, 384], sizes = [8, 128], strides = [1, 1]} : vector<8x512xf32> to vector<8x128xf32>
    %221 = arith.negf %220 : vector<8x128xf32>
    %222 = math.exp %221 : vector<8x128xf32>
    %cst_101 = arith.constant 1.000000e+00 : f32
    %223 = vector.broadcast %cst_101 : f32 to vector<8x128xf32>
    %224 = arith.addf %223, %222 : vector<8x128xf32>
    %225 = arith.divf %223, %224 : vector<8x128xf32>
    %226 = arith.mulf %217, %199 : vector<8x128xf32>
    %227 = arith.mulf %211, %219 : vector<8x128xf32>
    %228 = arith.addf %226, %227 : vector<8x128xf32>
    %229 = math.tanh %228 : vector<8x128xf32>
    %230 = arith.mulf %225, %229 : vector<8x128xf32>
    %c0_102 = arith.constant 0 : index
    %c0_103 = arith.constant 0 : index
    %231 = vector.load %arg8[%c0_102, %c0_103] : memref<8x128xf32, #tpu.memory_space<vmem>>, vector<8x128xf32>
    tpu.vector_store %arg8[%c0_102, %c0_103], %230 {strides = array<i32>} : memref<8x128xf32, #tpu.memory_space<vmem>>, vector<8x128xf32>,
    %c0_104 = arith.constant 0 : index
    %c0_105 = arith.constant 0 : index
    %232 = vector.load %arg9[%c0_104, %c0_105] : memref<8x128xf32, #tpu.memory_space<vmem>>, vector<8x128xf32>
    tpu.vector_store %arg9[%c0_104, %c0_105], %228 {strides = array<i32>} : memref<8x128xf32, #tpu.memory_space<vmem>>, vector<8x128xf32>,
    %233 = arith.index_cast %c5_i32 : i32 to index
    %c0_106 = arith.constant 0 : index
    %c0_107 = arith.constant 0 : index
    %234 = vector.load %arg6[%233, %c0_106, %c0_107] : memref<8x8x128xf32, #tpu.memory_space<vmem>>, vector<1x8x128xf32>
    %235 = vector.shape_cast %234 : vector<1x8x128xf32> to vector<8x128xf32>
    %236 = vector.shape_cast %230 : vector<8x128xf32> to vector<1x8x128xf32>
    tpu.vector_store %arg6[%233, %c0_106, %c0_107], %236 {strides = array<i32>} : memref<8x8x128xf32, #tpu.memory_space<vmem>>, vector<1x8x128xf32>,
    %c6_i32 = arith.constant 6 : i32
    %c0_108 = arith.constant 0 : index
    %c0_109 = arith.constant 0 : index
    %237 = vector.load %arg8[%c0_108, %c0_109] : memref<8x128xf32, #tpu.memory_space<vmem>>, vector<8x128xf32>
    %c0_110 = arith.constant 0 : index
    %c0_111 = arith.constant 0 : index
    %238 = vector.load %arg9[%c0_110, %c0_111] : memref<8x128xf32, #tpu.memory_space<vmem>>, vector<8x128xf32>
    %239 = arith.index_cast %c6_i32 : i32 to index
    %c0_112 = arith.constant 0 : index
    %c0_113 = arith.constant 0 : index
    %240 = vector.load %arg2[%239, %c0_112, %c0_113] : memref<8x8x512xf32, #tpu.memory_space<vmem>>, vector<1x8x512xf32>
    %241 = vector.shape_cast %240 : vector<1x8x512xf32> to vector<8x512xf32>
    %c0_114 = arith.constant 0 : index
    %c0_115 = arith.constant 0 : index
    %242 = vector.load %arg5[%c0_114, %c0_115] : memref<128x512xf32, #tpu.memory_space<vmem>>, vector<128x512xf32>
    %cst_116 = arith.constant dense<0.000000e+00> : vector<8x512xf32>
    %243 = tpu.matmul %237, %242, %cst_116 {dimension_numbers = #tpu.dot_dimension_numbers<[1], [0], [0], [1], [0, 0, 1, 1], [], []>} : vector<8x128xf32>, vector<128x512xf32>, vector<8x512xf32> -> vector<8x512xf32>
    %244 = arith.addf %241, %243 : vector<8x512xf32>
    %245 = vector.extract_strided_slice %244 {offsets = [0, 0], sizes = [8, 128], strides = [1, 1]} : vector<8x512xf32> to vector<8x128xf32>
    %246 = arith.negf %245 : vector<8x128xf32>
    %247 = math.exp %246 : vector<8x128xf32>
    %cst_117 = arith.constant 1.000000e+00 : f32
    %248 = vector.broadcast %cst_117 : f32 to vector<8x128xf32>
    %249 = arith.addf %248, %247 : vector<8x128xf32>
    %250 = arith.divf %248, %249 : vector<8x128xf32>
    %251 = vector.extract_strided_slice %244 {offsets = [0, 128], sizes = [8, 128], strides = [1, 1]} : vector<8x512xf32> to vector<8x128xf32>
    %252 = arith.negf %251 : vector<8x128xf32>
    %253 = math.exp %252 : vector<8x128xf32>
    %cst_118 = arith.constant 1.000000e+00 : f32
    %254 = vector.broadcast %cst_118 : f32 to vector<8x128xf32>
    %255 = arith.addf %254, %253 : vector<8x128xf32>
    %256 = arith.divf %254, %255 : vector<8x128xf32>
    %257 = vector.extract_strided_slice %244 {offsets = [0, 256], sizes = [8, 128], strides = [1, 1]} : vector<8x512xf32> to vector<8x128xf32>
    %258 = math.tanh %257 : vector<8x128xf32>
    %259 = vector.extract_strided_slice %244 {offsets = [0, 384], sizes = [8, 128], strides = [1, 1]} : vector<8x512xf32> to vector<8x128xf32>
    %260 = arith.negf %259 : vector<8x128xf32>
    %261 = math.exp %260 : vector<8x128xf32>
    %cst_119 = arith.constant 1.000000e+00 : f32
    %262 = vector.broadcast %cst_119 : f32 to vector<8x128xf32>
    %263 = arith.addf %262, %261 : vector<8x128xf32>
    %264 = arith.divf %262, %263 : vector<8x128xf32>
    %265 = arith.mulf %256, %238 : vector<8x128xf32>
    %266 = arith.mulf %250, %258 : vector<8x128xf32>
    %267 = arith.addf %265, %266 : vector<8x128xf32>
    %268 = math.tanh %267 : vector<8x128xf32>
    %269 = arith.mulf %264, %268 : vector<8x128xf32>
    %c0_120 = arith.constant 0 : index
    %c0_121 = arith.constant 0 : index
    %270 = vector.load %arg8[%c0_120, %c0_121] : memref<8x128xf32, #tpu.memory_space<vmem>>, vector<8x128xf32>
    tpu.vector_store %arg8[%c0_120, %c0_121], %269 {strides = array<i32>} : memref<8x128xf32, #tpu.memory_space<vmem>>, vector<8x128xf32>,
    %c0_122 = arith.constant 0 : index
    %c0_123 = arith.constant 0 : index
    %271 = vector.load %arg9[%c0_122, %c0_123] : memref<8x128xf32, #tpu.memory_space<vmem>>, vector<8x128xf32>
    tpu.vector_store %arg9[%c0_122, %c0_123], %267 {strides = array<i32>} : memref<8x128xf32, #tpu.memory_space<vmem>>, vector<8x128xf32>,
    %272 = arith.index_cast %c6_i32 : i32 to index
    %c0_124 = arith.constant 0 : index
    %c0_125 = arith.constant 0 : index
    %273 = vector.load %arg6[%272, %c0_124, %c0_125] : memref<8x8x128xf32, #tpu.memory_space<vmem>>, vector<1x8x128xf32>
    %274 = vector.shape_cast %273 : vector<1x8x128xf32> to vector<8x128xf32>
    %275 = vector.shape_cast %269 : vector<8x128xf32> to vector<1x8x128xf32>
    tpu.vector_store %arg6[%272, %c0_124, %c0_125], %275 {strides = array<i32>} : memref<8x8x128xf32, #tpu.memory_space<vmem>>, vector<1x8x128xf32>,
    %c7_i32 = arith.constant 7 : i32
    %c0_126 = arith.constant 0 : index
    %c0_127 = arith.constant 0 : index
    %276 = vector.load %arg8[%c0_126, %c0_127] : memref<8x128xf32, #tpu.memory_space<vmem>>, vector<8x128xf32>
    %c0_128 = arith.constant 0 : index
    %c0_129 = arith.constant 0 : index
    %277 = vector.load %arg9[%c0_128, %c0_129] : memref<8x128xf32, #tpu.memory_space<vmem>>, vector<8x128xf32>
    %278 = arith.index_cast %c7_i32 : i32 to index
    %c0_130 = arith.constant 0 : index
    %c0_131 = arith.constant 0 : index
    %279 = vector.load %arg2[%278, %c0_130, %c0_131] : memref<8x8x512xf32, #tpu.memory_space<vmem>>, vector<1x8x512xf32>
    %280 = vector.shape_cast %279 : vector<1x8x512xf32> to vector<8x512xf32>
    %c0_132 = arith.constant 0 : index
    %c0_133 = arith.constant 0 : index
    %281 = vector.load %arg5[%c0_132, %c0_133] : memref<128x512xf32, #tpu.memory_space<vmem>>, vector<128x512xf32>
    %cst_134 = arith.constant dense<0.000000e+00> : vector<8x512xf32>
    %282 = tpu.matmul %276, %281, %cst_134 {dimension_numbers = #tpu.dot_dimension_numbers<[1], [0], [0], [1], [0, 0, 1, 1], [], []>} : vector<8x128xf32>, vector<128x512xf32>, vector<8x512xf32> -> vector<8x512xf32>
    %283 = arith.addf %280, %282 : vector<8x512xf32>
    %284 = vector.extract_strided_slice %283 {offsets = [0, 0], sizes = [8, 128], strides = [1, 1]} : vector<8x512xf32> to vector<8x128xf32>
    %285 = arith.negf %284 : vector<8x128xf32>
    %286 = math.exp %285 : vector<8x128xf32>
    %cst_135 = arith.constant 1.000000e+00 : f32
    %287 = vector.broadcast %cst_135 : f32 to vector<8x128xf32>
    %288 = arith.addf %287, %286 : vector<8x128xf32>
    %289 = arith.divf %287, %288 : vector<8x128xf32>
    %290 = vector.extract_strided_slice %283 {offsets = [0, 128], sizes = [8, 128], strides = [1, 1]} : vector<8x512xf32> to vector<8x128xf32>
    %291 = arith.negf %290 : vector<8x128xf32>
    %292 = math.exp %291 : vector<8x128xf32>
    %cst_136 = arith.constant 1.000000e+00 : f32
    %293 = vector.broadcast %cst_136 : f32 to vector<8x128xf32>
    %294 = arith.addf %293, %292 : vector<8x128xf32>
    %295 = arith.divf %293, %294 : vector<8x128xf32>
    %296 = vector.extract_strided_slice %283 {offsets = [0, 256], sizes = [8, 128], strides = [1, 1]} : vector<8x512xf32> to vector<8x128xf32>
    %297 = math.tanh %296 : vector<8x128xf32>
    %298 = vector.extract_strided_slice %283 {offsets = [0, 384], sizes = [8, 128], strides = [1, 1]} : vector<8x512xf32> to vector<8x128xf32>
    %299 = arith.negf %298 : vector<8x128xf32>
    %300 = math.exp %299 : vector<8x128xf32>
    %cst_137 = arith.constant 1.000000e+00 : f32
    %301 = vector.broadcast %cst_137 : f32 to vector<8x128xf32>
    %302 = arith.addf %301, %300 : vector<8x128xf32>
    %303 = arith.divf %301, %302 : vector<8x128xf32>
    %304 = arith.mulf %295, %277 : vector<8x128xf32>
    %305 = arith.mulf %289, %297 : vector<8x128xf32>
    %306 = arith.addf %304, %305 : vector<8x128xf32>
    %307 = math.tanh %306 : vector<8x128xf32>
    %308 = arith.mulf %303, %307 : vector<8x128xf32>
    %c0_138 = arith.constant 0 : index
    %c0_139 = arith.constant 0 : index
    %309 = vector.load %arg8[%c0_138, %c0_139] : memref<8x128xf32, #tpu.memory_space<vmem>>, vector<8x128xf32>
    tpu.vector_store %arg8[%c0_138, %c0_139], %308 {strides = array<i32>} : memref<8x128xf32, #tpu.memory_space<vmem>>, vector<8x128xf32>,
    %c0_140 = arith.constant 0 : index
    %c0_141 = arith.constant 0 : index
    %310 = vector.load %arg9[%c0_140, %c0_141] : memref<8x128xf32, #tpu.memory_space<vmem>>, vector<8x128xf32>
    tpu.vector_store %arg9[%c0_140, %c0_141], %306 {strides = array<i32>} : memref<8x128xf32, #tpu.memory_space<vmem>>, vector<8x128xf32>,
    %311 = arith.index_cast %c7_i32 : i32 to index
    %c0_142 = arith.constant 0 : index
    %c0_143 = arith.constant 0 : index
    %312 = vector.load %arg6[%311, %c0_142, %c0_143] : memref<8x8x128xf32, #tpu.memory_space<vmem>>, vector<1x8x128xf32>
    %313 = vector.shape_cast %312 : vector<1x8x128xf32> to vector<8x128xf32>
    %314 = vector.shape_cast %308 : vector<8x128xf32> to vector<1x8x128xf32>
    tpu.vector_store %arg6[%311, %c0_142, %c0_143], %314 {strides = array<i32>} : memref<8x8x128xf32, #tpu.memory_space<vmem>>, vector<1x8x128xf32>,
    %c8_i32 = arith.constant 8 : i32
    %c0_i32_144 = arith.constant 0 : i32
    %315 = arith.cmpi eq, %arg1, %c0_i32_144 : i32
    %316 = arith.extui %315 : i1 to i32
    %c0_i32_145 = arith.constant 0 : i32
    %317 = arith.cmpi ne, %316, %c0_i32_145 : i32
    scf.if %317 {
      %c0_146 = arith.constant 0 : index
      %c0_147 = arith.constant 0 : index
      %318 = vector.load %arg9[%c0_146, %c0_147] : memref<8x128xf32, #tpu.memory_space<vmem>>, vector<8x128xf32>
      %c0_148 = arith.constant 0 : index
      %c0_149 = arith.constant 0 : index
      %319 = vector.load %arg7[%c0_148, %c0_149] : memref<8x128xf32, #tpu.memory_space<vmem>>, vector<8x128xf32>
      tpu.vector_store %arg7[%c0_148, %c0_149], %318 {strides = array<i32>} : memref<8x128xf32, #tpu.memory_space<vmem>>, vector<8x128xf32>,
    } else {
    }
    return
  }
  func.func @transform_0(%arg0: i32, %arg1: i32) -> (i32, i32, i32) {
    %c0_i32 = arith.constant 0 : i32
    %c0_i32_0 = arith.constant 0 : i32
    return %arg1, %arg0, %c0_i32 : i32, i32, i32
  }
  func.func @transform_1(%arg0: i32, %arg1: i32) -> (i32, i32) {
    %c0_i32 = arith.constant 0 : i32
    %c0_i32_0 = arith.constant 0 : i32
    return %arg0, %c0_i32 : i32, i32
  }
  func.func @transform_2(%arg0: i32, %arg1: i32) -> (i32, i32) {
    %c0_i32 = arith.constant 0 : i32
    %c0_i32_0 = arith.constant 0 : i32
    return %arg0, %c0_i32 : i32, i32
  }
  func.func @transform_3(%arg0: i32, %arg1: i32) -> (i32, i32) {
    %c0_i32 = arith.constant 0 : i32
    %c0_i32_0 = arith.constant 0 : i32
    %c0_i32_1 = arith.constant 0 : i32
    return %c0_i32, %c0_i32_0 : i32, i32
  }
  func.func @transform_4(%arg0: i32, %arg1: i32) -> (i32, i32, i32) {
    %c0_i32 = arith.constant 0 : i32
    %c0_i32_0 = arith.constant 0 : i32
    return %arg1, %arg0, %c0_i32 : i32, i32, i32
  }
  func.func @transform_5(%arg0: i32, %arg1: i32) -> (i32, i32) {
    %c0_i32 = arith.constant 0 : i32
    %c0_i32_0 = arith.constant 0 : i32
    return %arg0, %c0_i32 : i32, i32
  }
}

</mosaic_0001>

<llo_original>
// kernel: tpu_custom_call.1
$region0: #{tpu_custom_call.1}
  #allocation0 [shape = 'u32[]', space=smem, size = 0x4, offset = 0x4, fixed_abs, tag = 'smem constant byte address 0x4 - core index']
  #allocation1 [shape = 'u32[144,128]{1,0:T(1,128)}', space=vmem, size = 0x12000, scoped, tag = 'internal scratch']
  #allocation2 [shape = 'f32[8,128]{1,0:T(8,128)}', space=vmem, size = 0x1000, scoped, tag = 'scratch operand']
  #allocation3 [shape = 'f32[8,128]{1,0:T(8,128)}', space=vmem, size = 0x1000, scoped, tag = 'scratch operand']
  %s0 = inlined_call_operand.hbm [shape: f32[8,8,512], index: 0, kind: input, shape index: {}]
  %s1 = inlined_call_operand.hbm [shape: f32[8,128], index: 1, kind: input, shape index: {}]
  %s2 = inlined_call_operand.hbm [shape: f32[8,128], index: 2, kind: input, shape index: {}]
  %s3 = inlined_call_operand.hbm [shape: f32[128,512], index: 3, kind: input, shape index: {}]
  %s4 = inlined_call_operand.hbm [shape: f32[8,8,128], index: 4, kind: output, shape index: {0}]
  %s5 = inlined_call_operand.hbm [shape: f32[8,128], index: 5, kind: output, shape index: {1}]
  %6 = xla_tuple %s4, %s5
  %s7 = sld [smem:[#allocation0]]
  $region58: #{tpu_custom_call.1} parent=0
    _
  %s9 = ssub.s32 1, %s7
  %s10 = scalar_select 0, %s9, %s7
  $region1: #{tpu_custom_call.1} parent=0
    #allocation4 [shape = 'u8[131072]{0}', space=vmem, size = 0x20000, scoped, tag = 'input window, operand 0, single buffered']
    #allocation5 [shape = 's32[1]{0}', space=sflag, size = 0x4, scoped, tag = 'scoped memory for tpu_custom_call.1']
    #allocation6 [shape = 's32[1]{0}', space=sflag, size = 0x4, scoped, tag = 'scoped memory for tpu_custom_call.1']
    #allocation7 [shape = 'u8[4096]{0}', space=vmem, size = 0x1000, scoped, tag = 'input window, operand 1, single buffered']
    #allocation8 [shape = 's32[1]{0}', space=sflag, size = 0x4, scoped, tag = 'scoped memory for tpu_custom_call.1']
    #allocation9 [shape = 'u8[4096]{0}', space=vmem, size = 0x1000, scoped, tag = 'input window, operand 2, single buffered']
    #allocation10 [shape = 'u8[262144]{0}', space=vmem, size = 0x40000, scoped, tag = 'input window, operand 3, single buffered']
    #allocation11 [shape = 's32[1]{0}', space=sflag, size = 0x4, scoped, tag = 'scoped memory for tpu_custom_call.1']
    #allocation12 [shape = 'u8[32768]{0}', space=vmem, size = 0x8000, scoped, tag = 'output window, operand 0, single buffered']
    #allocation13 [shape = 'u8[4096]{0}', space=vmem, size = 0x1000, scoped, tag = 'output window, operand 1, single buffered']
    #allocation14 [shape = 's32[1]{0}', space=sflag, size = 0x4, scoped, tag = 'scoped memory for tpu_custom_call.1']
    %11 = vsyncpa [#allocation5], 0
    %12 = vsyncpa [#allocation8], 0
    %13 = vsyncpa [#allocation11], 0
    %14 = vsyncpa [#allocation6], 0
    %15 = vsyncpa [#allocation14], 0
    // Predicated region
    $region2: #{tpu_custom_call.1} parent=1 // pred_check
      _
    $region3: #{tpu_custom_call.1} parent=1 // pred_check_branch
      %17 = sbr.rel (0) target = $region5
    $region4: #{tpu_custom_call.1} parent=1 // pred_region
      %s19 = ssub.s32 4096, 4096
      %20 = vsyncadd [#allocation5], %s19
      %s21 = sshll.u32 [#allocation4], 4
      %s22 = int_to_ptr.vmem [resolvable:$true] %s21
      %27 = dma.hbm_to_vmem [thread:$0]  %s0, 4096, %s22, [#allocation5], 512, 512, 32
    $region5: #{tpu_custom_call.1} parent=1 // pred_fallthru
      _
    // Predicated region
    $region6: #{tpu_custom_call.1} parent=1 // pred_check
      _
    $region7: #{tpu_custom_call.1} parent=1 // pred_check_branch
      %29 = sbr.rel (0) target = $region9
    $region8: #{tpu_custom_call.1} parent=1 // pred_region
      %s31 = ssub.s32 128, 128
      %32 = vsyncadd [#allocation8], %s31
      %s34 = sshll.u32 [#allocation7], 4
      %s35 = int_to_ptr.vmem [resolvable:$true] %s34
      %37 = dma.hbm_to_vmem [thread:$0]  %s1, 128, %s35, [#allocation8]
    $region9: #{tpu_custom_call.1} parent=1 // pred_fallthru
      _
    // Predicated region
    $region10: #{tpu_custom_call.1} parent=1 // pred_check
      _
    $region11: #{tpu_custom_call.1} parent=1 // pred_check_branch
      %39 = sbr.rel (0) target = $region13
    $region12: #{tpu_custom_call.1} parent=1 // pred_region
      %s41 = ssub.s32 128, 128
      %42 = vsyncadd [#allocation8], %s41
      %s44 = sshll.u32 [#allocation9], 4
      %s45 = int_to_ptr.vmem [resolvable:$true] %s44
      %47 = dma.hbm_to_vmem [thread:$0]  %s2, 128, %s45, [#allocation8]
    $region13: #{tpu_custom_call.1} parent=1 // pred_fallthru
      _
    // Predicated region
    $region14: #{tpu_custom_call.1} parent=1 // pred_check
      _
    $region15: #{tpu_custom_call.1} parent=1 // pred_check_branch
      %49 = sbr.rel (0) target = $region17
    $region16: #{tpu_custom_call.1} parent=1 // pred_region
      %s51 = ssub.s32 8192, 8192
      %52 = vsyncadd [#allocation11], %s51
      %s53 = sshll.u32 [#allocation10], 4
      %s54 = int_to_ptr.vmem [resolvable:$true] %s53
      %59 = dma.hbm_to_vmem [thread:$0]  %s3, 8192, %s54, [#allocation11], 512, 512, 32
    $region17: #{tpu_custom_call.1} parent=1 // pred_fallthru
      _
    // Predicated region
    $region18: #{tpu_custom_call.1} parent=1 // pred_check
      _
    $region19: #{tpu_custom_call.1} parent=1 // pred_check_branch
      %61 = sbr.rel (0) target = $region21
    $region20: #{tpu_custom_call.1} parent=1 // pred_region
      %62 = dma.done [#allocation5], 4096
    $region21: #{tpu_custom_call.1} parent=1 // pred_fallthru
      _
    // Predicated region
    $region22: #{tpu_custom_call.1} parent=1 // pred_check
      _
    $region23: #{tpu_custom_call.1} parent=1 // pred_check_branch
      %64 = sbr.rel (0) target = $region25
    $region24: #{tpu_custom_call.1} parent=1 // pred_region
      %65 = dma.done [#allocation8], 128
    $region25: #{tpu_custom_call.1} parent=1 // pred_fallthru
      _
    // Predicated region
    $region26: #{tpu_custom_call.1} parent=1 // pred_check
      _
    $region27: #{tpu_custom_call.1} parent=1 // pred_check_branch
      %67 = sbr.rel (0) target = $region29
    $region28: #{tpu_custom_call.1} parent=1 // pred_region
      %68 = dma.done [#allocation8], 128
    $region29: #{tpu_custom_call.1} parent=1 // pred_fallthru
      _
    // Predicated region
    $region30: #{tpu_custom_call.1} parent=1 // pred_check
      _
    $region31: #{tpu_custom_call.1} parent=1 // pred_check_branch
      %70 = sbr.rel (0) target = $region33
    $region32: #{tpu_custom_call.1} parent=1 // pred_region
      %71 = dma.done [#allocation11], 8192
    $region33: #{tpu_custom_call.1} parent=1 // pred_fallthru
      _
    %p72 = scmp.eq.s32.totalorder 0, 0
    // Predicated region
    $region34: #{tpu_custom_call.1} parent=1 // pred_check
      %p73 = pneg %p72
    $region35: #{tpu_custom_call.1} parent=1 // pred_check_branch
      %75 = sbr.rel (%p73) target = $region37
    $region36: #{tpu_custom_call.1} parent=1 // pred_region
      %v76 = vld [vmem:[#allocation7] sm:$0xff]
      %77 = vst [vmem:[#allocation2] sm:$0xff] %v76
      %v78 = vld [vmem:[#allocation9] sm:$0xff]
      %79 = vst [vmem:[#allocation3] sm:$0xff] %v78
    $region37: #{tpu_custom_call.1} parent=1 // pred_fallthru
      _
    %v80 = vld [vmem:[#allocation2] sm:$0xff]
    %v81 = vld [vmem:[#allocation3] sm:$0xff]
    %v82 = vld [vmem:[#allocation4] sm:$0xff]
    %v83 = vld [vmem:[#allocation4 + $0x8] sm:$0xff]
    %v84 = vld [vmem:[#allocation4 + $0x10] sm:$0xff]
    %v85 = vld [vmem:[#allocation4 + $0x18] sm:$0xff]
    %v86 = vld [vmem:[#allocation10] sm:$0xff]
    %v87 = vld [vmem:[#allocation10 + $0x8] sm:$0xff]
    %v88 = vld [vmem:[#allocation10 + $0x10] sm:$0xff]
    %v89 = vld [vmem:[#allocation10 + $0x18] sm:$0xff]
    %v90 = vld [vmem:[#allocation10 + $0x20] sm:$0xff]
    %v91 = vld [vmem:[#allocation10 + $0x28] sm:$0xff]
    %v92 = vld [vmem:[#allocation10 + $0x30] sm:$0xff]
    %v93 = vld [vmem:[#allocation10 + $0x38] sm:$0xff]
    %v94 = vld [vmem:[#allocation10 + $0x40] sm:$0xff]
    %v95 = vld [vmem:[#allocation10 + $0x48] sm:$0xff]
    %v96 = vld [vmem:[#allocation10 + $0x50] sm:$0xff]
    %v97 = vld [vmem:[#allocation10 + $0x58] sm:$0xff]
    %v98 = vld [vmem:[#allocation10 + $0x60] sm:$0xff]
    %v99 = vld [vmem:[#allocation10 + $0x68] sm:$0xff]
    %v100 = vld [vmem:[#allocation10 + $0x70] sm:$0xff]
    %v101 = vld [vmem:[#allocation10 + $0x78] sm:$0xff]
    %v102 = vld [vmem:[#allocation10 + $0x80] sm:$0xff]
    %v103 = vld [vmem:[#allocation10 + $0x88] sm:$0xff]
    %v104 = vld [vmem:[#allocation10 + $0x90] sm:$0xff]
    %v105 = vld [vmem:[#allocation10 + $0x98] sm:$0xff]
    %v106 = vld [vmem:[#allocation10 + $0xa0] sm:$0xff]
    %v107 = vld [vmem:[#allocation10 + $0xa8] sm:$0xff]
    %v108 = vld [vmem:[#allocation10 + $0xb0] sm:$0xff]
    %v109 = vld [vmem:[#allocation10 + $0xb8] sm:$0xff]
    %v110 = vld [vmem:[#allocation10 + $0xc0] sm:$0xff]
    %v111 = vld [vmem:[#allocation10 + $0xc8] sm:$0xff]
    %v112 = vld [vmem:[#allocation10 + $0xd0] sm:$0xff]
    %v113 = vld [vmem:[#allocation10 + $0xd8] sm:$0xff]
    %v114 = vld [vmem:[#allocation10 + $0xe0] sm:$0xff]
    %v115 = vld [vmem:[#allocation10 + $0xe8] sm:$0xff]
    %v116 = vld [vmem:[#allocation10 + $0xf0] sm:$0xff]
    %v117 = vld [vmem:[#allocation10 + $0xf8] sm:$0xff]
    %v118 = vld [vmem:[#allocation10 + $0x100] sm:$0xff]
    %v119 = vld [vmem:[#allocation10 + $0x108] sm:$0xff]
    %v120 = vld [vmem:[#allocation10 + $0x110] sm:$0xff]
    %v121 = vld [vmem:[#allocation10 + $0x118] sm:$0xff]
    %v122 = vld [vmem:[#allocation10 + $0x120] sm:$0xff]
    %v123 = vld [vmem:[#allocation10 + $0x128] sm:$0xff]
    %v124 = vld [vmem:[#allocation10 + $0x130] sm:$0xff]
    %v125 = vld [vmem:[#allocation10 + $0x138] sm:$0xff]
    %v126 = vld [vmem:[#allocation10 + $0x140] sm:$0xff]
    %v127 = vld [vmem:[#allocation10 + $0x148] sm:$0xff]
    %v128 = vld [vmem:[#allocation10 + $0x150] sm:$0xff]
    %v129 = vld [vmem:[#allocation10 + $0x158] sm:$0xff]
    %v130 = vld [vmem:[#allocation10 + $0x160] sm:$0xff]
    %v131 = vld [vmem:[#allocation10 + $0x168] sm:$0xff]
    %v132 = vld [vmem:[#allocation10 + $0x170] sm:$0xff]
    %v133 = vld [vmem:[#allocation10 + $0x178] sm:$0xff]
    %v134 = vld [vmem:[#allocation10 + $0x180] sm:$0xff]
    %v135 = vld [vmem:[#allocation10 + $0x188] sm:$0xff]
    %v136 = vld [vmem:[#allocation10 + $0x190] sm:$0xff]
    %v137 = vld [vmem:[#allocation10 + $0x198] sm:$0xff]
    %v138 = vld [vmem:[#allocation10 + $0x1a0] sm:$0xff]
    %v139 = vld [vmem:[#allocation10 + $0x1a8] sm:$0xff]
    %v140 = vld [vmem:[#allocation10 + $0x1b0] sm:$0xff]
    %v141 = vld [vmem:[#allocation10 + $0x1b8] sm:$0xff]
    %v142 = vld [vmem:[#allocation10 + $0x1c0] sm:$0xff]
    %v143 = vld [vmem:[#allocation10 + $0x1c8] sm:$0xff]
    %v144 = vld [vmem:[#allocation10 + $0x1d0] sm:$0xff]
    %v145 = vld [vmem:[#allocation10 + $0x1d8] sm:$0xff]
    %v146 = vld [vmem:[#allocation10 + $0x1e0] sm:$0xff]
    %v147 = vld [vmem:[#allocation10 + $0x1e8] sm:$0xff]
    %v148 = vld [vmem:[#allocation10 + $0x1f0] sm:$0xff]
    %v149 = vld [vmem:[#allocation10 + $0x1f8] sm:$0xff]
    %150 = vmatprep.subr.mxu0 %v87
    %151 = vmatpush1.msra.mxu0 %v86
    %152 = vmatprep.subr.mxu0 %v91
    %153 = vmatpush1.msra.mxu0 %v90
    %154 = vmatprep.subr.mxu0 %v95
    %155 = vmatpush1.msra.mxu0 %v94
    %156 = vmatprep.subr.mxu0 %v99
    %157 = vmatpush1.msra.mxu0 %v98
    %158 = vmatprep.subr.mxu0 %v103
    %159 = vmatpush1.msra.mxu0 %v102
    %160 = vmatprep.subr.mxu0 %v107
    %161 = vmatpush1.msra.mxu0 %v106
    %162 = vmatprep.subr.mxu0 %v111
    %163 = vmatpush1.msra.mxu0 %v110
    %164 = vmatprep.subr.mxu0 %v115
    %165 = vmatpush1.msra.mxu0 %v114
    %166 = vmatprep.subr.mxu0 %v119
    %167 = vmatpush1.msra.mxu0 %v118
    %168 = vmatprep.subr.mxu0 %v123
    %169 = vmatpush1.msra.mxu0 %v122
    %170 = vmatprep.subr.mxu0 %v127
    %171 = vmatpush1.msra.mxu0 %v126
    %172 = vmatprep.subr.mxu0 %v131
    %173 = vmatpush1.msra.mxu0 %v130
    %174 = vmatprep.subr.mxu0 %v135
    %175 = vmatpush1.msra.mxu0 %v134
    %176 = vmatprep.subr.mxu0 %v139
    %177 = vmatpush1.msra.mxu0 %v138
    %178 = vmatprep.subr.mxu0 %v143
    %179 = vmatpush1.msra.mxu0 %v142
    %180 = vmatprep.subr.mxu0 %v147
    %181 = vmatpush1.msra.mxu0 %v146
    %182 = vmatprep.subr.mxu0 0.0
    %183 = vmatpush1.msra.mxu0 0.0
    %184 = vmatprep.subr.mxu0 0.0
    %185 = vmatpush1.msra.mxu0 0.0
    %186 = vmatprep.subr.mxu0 0.0
    %187 = vmatpush1.msra.mxu0 0.0
    %188 = vmatprep.subr.mxu0 0.0
    %189 = vmatpush1.msra.mxu0 0.0
    %190 = vmatprep.subr.mxu0 0.0
    %191 = vmatpush1.msra.mxu0 0.0
    %192 = vmatprep.subr.mxu0 0.0
    %193 = vmatpush1.msra.mxu0 0.0
    %194 = vmatprep.subr.mxu0 0.0
    %195 = vmatpush1.msra.mxu0 0.0
    %196 = vmatprep.subr.mxu0 0.0
    %197 = vmatpush1.msra.mxu0 0.0
    %198 = vmatprep.subr.mxu0 0.0
    %199 = vmatpush1.msra.mxu0 0.0
    %200 = vmatprep.subr.mxu0 0.0
    %201 = vmatpush1.msra.mxu0 0.0
    %202 = vmatprep.subr.mxu0 0.0
    %203 = vmatpush1.msra.mxu0 0.0
    %204 = vmatprep.subr.mxu0 0.0
    %205 = vmatpush1.msra.mxu0 0.0
    %206 = vmatprep.subr.mxu0 0.0
    %207 = vmatpush1.msra.mxu0 0.0
    %208 = vmatprep.subr.mxu0 0.0
    %209 = vmatpush1.msra.mxu0 0.0
    %210 = vmatprep.subr.mxu0 0.0
    %211 = vmatpush1.msra.mxu0 0.0
    %212 = vmatprep.subr.mxu0 0.0
    %213 = vmatpush1.msra.mxu0 0.0
    %214 = vmatprep.mubr.f32.mxu0 0.0
    %215 = vmatmul.mubr.f32.gmra.mrb[0].mxu0 %v80
    %v216 = vpop.f32.mrb[0].mxu0
    %v217 = vadd.f32 0.0, %v216
    %v218 = vpop.f32.mrb[0].mxu0
    %v219 = vadd.f32 0.0, %v218
    %220 = vdwg.mxu0
    %221 = vmatprep.subr.mxu0 %v89
    %222 = vmatpush1.msra.mxu0 %v88
    %223 = vmatprep.subr.mxu0 %v93
    %224 = vmatpush1.msra.mxu0 %v92
    %225 = vmatprep.subr.mxu0 %v97
    %226 = vmatpush1.msra.mxu0 %v96
    %227 = vmatprep.subr.mxu0 %v101
    %228 = vmatpush1.msra.mxu0 %v100
    %229 = vmatprep.subr.mxu0 %v105
    %230 = vmatpush1.msra.mxu0 %v104
    %231 = vmatprep.subr.mxu0 %v109
    %232 = vmatpush1.msra.mxu0 %v108
    %233 = vmatprep.subr.mxu0 %v113
    %234 = vmatpush1.msra.mxu0 %v112
    %235 = vmatprep.subr.mxu0 %v117
    %236 = vmatpush1.msra.mxu0 %v116
    %237 = vmatprep.subr.mxu0 %v121
    %238 = vmatpush1.msra.mxu0 %v120
    %239 = vmatprep.subr.mxu0 %v125
    %240 = vmatpush1.msra.mxu0 %v124
    %241 = vmatprep.subr.mxu0 %v129
    %242 = vmatpush1.msra.mxu0 %v128
    %243 = vmatprep.subr.mxu0 %v133
    %244 = vmatpush1.msra.mxu0 %v132
    %245 = vmatprep.subr.mxu0 %v137
    %246 = vmatpush1.msra.mxu0 %v136
    %247 = vmatprep.subr.mxu0 %v141
    %248 = vmatpush1.msra.mxu0 %v140
    %249 = vmatprep.subr.mxu0 %v145
    %250 = vmatpush1.msra.mxu0 %v144
    %251 = vmatprep.subr.mxu0 %v149
    %252 = vmatpush1.msra.mxu0 %v148
    %253 = vmatprep.subr.mxu0 0.0
    %254 = vmatpush1.msra.mxu0 0.0
    %255 = vmatprep.subr.mxu0 0.0
    %256 = vmatpush1.msra.mxu0 0.0
    %257 = vmatprep.subr.mxu0 0.0
    %258 = vmatpush1.msra.mxu0 0.0
    %259 = vmatprep.subr.mxu0 0.0
    %260 = vmatpush1.msra.mxu0 0.0
    %261 = vmatprep.subr.mxu0 0.0
    %262 = vmatpush1.msra.mxu0 0.0
    %263 = vmatprep.subr.mxu0 0.0
    %264 = vmatpush1.msra.mxu0 0.0
    %265 = vmatprep.subr.mxu0 0.0
    %266 = vmatpush1.msra.mxu0 0.0
    %267 = vmatprep.subr.mxu0 0.0
    %268 = vmatpush1.msra.mxu0 0.0
    %269 = vmatprep.subr.mxu0 0.0
    %270 = vmatpush1.msra.mxu0 0.0
    %271 = vmatprep.subr.mxu0 0.0
    %272 = vmatpush1.msra.mxu0 0.0
    %273 = vmatprep.subr.mxu0 0.0
    %274 = vmatpush1.msra.mxu0 0.0
    %275 = vmatprep.subr.mxu0 0.0
    %276 = vmatpush1.msra.mxu0 0.0
    %277 = vmatprep.subr.mxu0 0.0
    %278 = vmatpush1.msra.mxu0 0.0
    %279 = vmatprep.subr.mxu0 0.0
    %280 = vmatpush1.msra.mxu0 0.0
    %281 = vmatprep.subr.mxu0 0.0
    %282 = vmatpush1.msra.mxu0 0.0
    %283 = vmatprep.subr.mxu0 0.0
    %284 = vmatpush1.msra.mxu0 0.0
    %285 = vmatprep.mubr.f32.mxu0 0.0
    %286 = vmatmul.mubr.f32.gmra.mrb[0].mxu0 %v80
    %v287 = vpop.f32.mrb[0].mxu0
    %v288 = vadd.f32 0.0, %v287
    %v289 = vpop.f32.mrb[0].mxu0
    %v290 = vadd.f32 0.0, %v289
    %291 = vdwg.mxu0
    %v292 = vadd.f32 %v82, %v217
    %v293 = vadd.f32 %v83, %v219
    %v294 = vadd.f32 %v84, %v288
    %v295 = vadd.f32 %v85, %v290
    %v296 = vxor.u32 %v292, 2147483648
    %v297 = vmul.f32 %v296, 1.442695
    %v298 = vpow.pop %v297
    %v299 = vadd.f32 %v298, 1.0
    %v300 = vrcp.pop %v299
    %v301 = vmul.f32 1.0, %v300
    %v302 = vxor.u32 %v293, 2147483648
    %v303 = vmul.f32 %v302, 1.442695
    %v304 = vpow.pop %v303
    %v305 = vadd.f32 %v304, 1.0
    %v306 = vrcp.pop %v305
    %v307 = vmul.f32 1.0, %v306
    %v308 = vtanh.pop %v294
    %v309 = vxor.u32 %v295, 2147483648
    %v310 = vmul.f32 %v309, 1.442695
    %v311 = vpow.pop %v310
    %v312 = vadd.f32 %v311, 1.0
    %v313 = vrcp.pop %v312
    %v314 = vmul.f32 1.0, %v313
    %v315 = vmul.f32 %v307, %v81
    %v316 = vmul.f32 %v301, %v308
    %v317 = vadd.f32 %v315, %v316
    %v318 = vtanh.pop %v317
    %v319 = vmul.f32 %v314, %v318
    %320 = vst [vmem:[#allocation2] sm:$0xff] %v319
    %321 = vst [vmem:[#allocation3] sm:$0xff] %v317
    %322 = vst [vmem:[#allocation12] sm:$0xff] %v319
    %v323 = vld [vmem:[#allocation2] sm:$0xff]
    %v324 = vld [vmem:[#allocation3] sm:$0xff]
    %s325 = scalar_lea.vmem [#allocation4], 32
    %v326 = vld [vmem:[%s325] sm:$0xff]
    %v327 = vld [vmem:[%s325 + $0x8] sm:$0xff]
    %v328 = vld [vmem:[%s325 + $0x10] sm:$0xff]
    %v329 = vld [vmem:[%s325 + $0x18] sm:$0xff]
    %v330 = vld [vmem:[#allocation10] sm:$0xff]
    %v331 = vld [vmem:[#allocation10 + $0x8] sm:$0xff]
    %v332 = vld [vmem:[#allocation10 + $0x10] sm:$0xff]
    %v333 = vld [vmem:[#allocation10 + $0x18] sm:$0xff]
    %v334 = vld [vmem:[#allocation10 + $0x20] sm:$0xff]
    %v335 = vld [vmem:[#allocation10 + $0x28] sm:$0xff]
    %v336 = vld [vmem:[#allocation10 + $0x30] sm:$0xff]
    %v337 = vld [vmem:[#allocation10 + $0x38] sm:$0xff]
    %v338 = vld [vmem:[#allocation10 + $0x40] sm:$0xff]
    %v339 = vld [vmem:[#allocation10 + $0x48] sm:$0xff]
    %v340 = vld [vmem:[#allocation10 + $0x50] sm:$0xff]
    %v341 = vld [vmem:[#allocation10 + $0x58] sm:$0xff]
    %v342 = vld [vmem:[#allocation10 + $0x60] sm:$0xff]
    %v343 = vld [vmem:[#allocation10 + $0x68] sm:$0xff]
    %v344 = vld [vmem:[#allocation10 + $0x70] sm:$0xff]
    %v345 = vld [vmem:[#allocation10 + $0x78] sm:$0xff]
    %v346 = vld [vmem:[#allocation10 + $0x80] sm:$0xff]
    %v347 = vld [vmem:[#allocation10 + $0x88] sm:$0xff]
    %v348 = vld [vmem:[#allocation10 + $0x90] sm:$0xff]
    %v349 = vld [vmem:[#allocation10 + $0x98] sm:$0xff]
    %v350 = vld [vmem:[#allocation10 + $0xa0] sm:$0xff]
    %v351 = vld [vmem:[#allocation10 + $0xa8] sm:$0xff]
    %v352 = vld [vmem:[#allocation10 + $0xb0] sm:$0xff]
    %v353 = vld [vmem:[#allocation10 + $0xb8] sm:$0xff]
    %v354 = vld [vmem:[#allocation10 + $0xc0] sm:$0xff]
    %v355 = vld [vmem:[#allocation10 + $0xc8] sm:$0xff]
    %v356 = vld [vmem:[#allocation10 + $0xd0] sm:$0xff]
    %v357 = vld [vmem:[#allocation10 + $0xd8] sm:$0xff]
    %v358 = vld [vmem:[#allocation10 + $0xe0] sm:$0xff]
    %v359 = vld [vmem:[#allocation10 + $0xe8] sm:$0xff]
    %v360 = vld [vmem:[#allocation10 + $0xf0] sm:$0xff]
    %v361 = vld [vmem:[#allocation10 + $0xf8] sm:$0xff]
    %v362 = vld [vmem:[#allocation10 + $0x100] sm:$0xff]
    %v363 = vld [vmem:[#allocation10 + $0x108] sm:$0xff]
    %v364 = vld [vmem:[#allocation10 + $0x110] sm:$0xff]
    %v365 = vld [vmem:[#allocation10 + $0x118] sm:$0xff]
    %v366 = vld [vmem:[#allocation10 + $0x120] sm:$0xff]
    %v367 = vld [vmem:[#allocation10 + $0x128] sm:$0xff]
    %v368 = vld [vmem:[#allocation10 + $0x130] sm:$0xff]
    %v369 = vld [vmem:[#allocation10 + $0x138] sm:$0xff]
    %v370 = vld [vmem:[#allocation10 + $0x140] sm:$0xff]
    %v371 = vld [vmem:[#allocation10 + $0x148] sm:$0xff]
    %v372 = vld [vmem:[#allocation10 + $0x150] sm:$0xff]
    %v373 = vld [vmem:[#allocation10 + $0x158] sm:$0xff]
    %v374 = vld [vmem:[#allocation10 + $0x160] sm:$0xff]
    %v375 = vld [vmem:[#allocation10 + $0x168] sm:$0xff]
    %v376 = vld [vmem:[#allocation10 + $0x170] sm:$0xff]
    %v377 = vld [vmem:[#allocation10 + $0x178] sm:$0xff]
    %v378 = vld [vmem:[#allocation10 + $0x180] sm:$0xff]
    %v379 = vld [vmem:[#allocation10 + $0x188] sm:$0xff]
    %v380 = vld [vmem:[#allocation10 + $0x190] sm:$0xff]
    %v381 = vld [vmem:[#allocation10 + $0x198] sm:$0xff]
    %v382 = vld [vmem:[#allocation10 + $0x1a0] sm:$0xff]
    %v383 = vld [vmem:[#allocation10 + $0x1a8] sm:$0xff]
    %v384 = vld [vmem:[#allocation10 + $0x1b0] sm:$0xff]
    %v385 = vld [vmem:[#allocation10 + $0x1b8] sm:$0xff]
    %v386 = vld [vmem:[#allocation10 + $0x1c0] sm:$0xff]
    %v387 = vld [vmem:[#allocation10 + $0x1c8] sm:$0xff]
    %v388 = vld [vmem:[#allocation10 + $0x1d0] sm:$0xff]
    %v389 = vld [vmem:[#allocation10 + $0x1d8] sm:$0xff]
    %v390 = vld [vmem:[#allocation10 + $0x1e0] sm:$0xff]
    %v391 = vld [vmem:[#allocation10 + $0x1e8] sm:$0xff]
    %v392 = vld [vmem:[#allocation10 + $0x1f0] sm:$0xff]
    %v393 = vld [vmem:[#allocation10 + $0x1f8] sm:$0xff]
    %394 = vmatprep.subr.mxu0 %v331
    %395 = vmatpush1.msra.mxu0 %v330
    %396 = vmatprep.subr.mxu0 %v335
    %397 = vmatpush1.msra.mxu0 %v334
    %398 = vmatprep.subr.mxu0 %v339
    %399 = vmatpush1.msra.mxu0 %v338
    %400 = vmatprep.subr.mxu0 %v343
    %401 = vmatpush1.msra.mxu0 %v342
    %402 = vmatprep.subr.mxu0 %v347
    %403 = vmatpush1.msra.mxu0 %v346
    %404 = vmatprep.subr.mxu0 %v351
    %405 = vmatpush1.msra.mxu0 %v350
    %406 = vmatprep.subr.mxu0 %v355
    %407 = vmatpush1.msra.mxu0 %v354
    %408 = vmatprep.subr.mxu0 %v359
    %409 = vmatpush1.msra.mxu0 %v358
    %410 = vmatprep.subr.mxu0 %v363
    %411 = vmatpush1.msra.mxu0 %v362
    %412 = vmatprep.subr.mxu0 %v367
    %413 = vmatpush1.msra.mxu0 %v366
    %414 = vmatprep.subr.mxu0 %v371
    %415 = vmatpush1.msra.mxu0 %v370
    %416 = vmatprep.subr.mxu0 %v375
    %417 = vmatpush1.msra.mxu0 %v374
    %418 = vmatprep.subr.mxu0 %v379
    %419 = vmatpush1.msra.mxu0 %v378
    %420 = vmatprep.subr.mxu0 %v383
    %421 = vmatpush1.msra.mxu0 %v382
    %422 = vmatprep.subr.mxu0 %v387
    %423 = vmatpush1.msra.mxu0 %v386
    %424 = vmatprep.subr.mxu0 %v391
    %425 = vmatpush1.msra.mxu0 %v390
    %426 = vmatprep.subr.mxu0 0.0
    %427 = vmatpush1.msra.mxu0 0.0
    %428 = vmatprep.subr.mxu0 0.0
    %429 = vmatpush1.msra.mxu0 0.0
    %430 = vmatprep.subr.mxu0 0.0
    %431 = vmatpush1.msra.mxu0 0.0
    %432 = vmatprep.subr.mxu0 0.0
    %433 = vmatpush1.msra.mxu0 0.0
    %434 = vmatprep.subr.mxu0 0.0
    %435 = vmatpush1.msra.mxu0 0.0
    %436 = vmatprep.subr.mxu0 0.0
    %437 = vmatpush1.msra.mxu0 0.0
    %438 = vmatprep.subr.mxu0 0.0
    %439 = vmatpush1.msra.mxu0 0.0
    %440 = vmatprep.subr.mxu0 0.0
    %441 = vmatpush1.msra.mxu0 0.0
    %442 = vmatprep.subr.mxu0 0.0
    %443 = vmatpush1.msra.mxu0 0.0
    %444 = vmatprep.subr.mxu0 0.0
    %445 = vmatpush1.msra.mxu0 0.0
    %446 = vmatprep.subr.mxu0 0.0
    %447 = vmatpush1.msra.mxu0 0.0
    %448 = vmatprep.subr.mxu0 0.0
    %449 = vmatpush1.msra.mxu0 0.0
    %450 = vmatprep.subr.mxu0 0.0
    %451 = vmatpush1.msra.mxu0 0.0
    %452 = vmatprep.subr.mxu0 0.0
    %453 = vmatpush1.msra.mxu0 0.0
    %454 = vmatprep.subr.mxu0 0.0
    %455 = vmatpush1.msra.mxu0 0.0
    %456 = vmatprep.subr.mxu0 0.0
    %457 = vmatpush1.msra.mxu0 0.0
    %458 = vmatprep.mubr.f32.mxu0 0.0
    %459 = vmatmul.mubr.f32.gmra.mrb[0].mxu0 %v323
    %v460 = vpop.f32.mrb[0].mxu0
    %v461 = vadd.f32 0.0, %v460
    %v462 = vpop.f32.mrb[0].mxu0
    %v463 = vadd.f32 0.0, %v462
    %464 = vdwg.mxu0
    %465 = vmatprep.subr.mxu0 %v333
    %466 = vmatpush1.msra.mxu0 %v332
    %467 = vmatprep.subr.mxu0 %v337
    %468 = vmatpush1.msra.mxu0 %v336
    %469 = vmatprep.subr.mxu0 %v341
    %470 = vmatpush1.msra.mxu0 %v340
    %471 = vmatprep.subr.mxu0 %v345
    %472 = vmatpush1.msra.mxu0 %v344
    %473 = vmatprep.subr.mxu0 %v349
    %474 = vmatpush1.msra.mxu0 %v348
    %475 = vmatprep.subr.mxu0 %v353
    %476 = vmatpush1.msra.mxu0 %v352
    %477 = vmatprep.subr.mxu0 %v357
    %478 = vmatpush1.msra.mxu0 %v356
    %479 = vmatprep.subr.mxu0 %v361
    %480 = vmatpush1.msra.mxu0 %v360
    %481 = vmatprep.subr.mxu0 %v365
    %482 = vmatpush1.msra.mxu0 %v364
    %483 = vmatprep.subr.mxu0 %v369
    %484 = vmatpush1.msra.mxu0 %v368
    %485 = vmatprep.subr.mxu0 %v373
    %486 = vmatpush1.msra.mxu0 %v372
    %487 = vmatprep.subr.mxu0 %v377
    %488 = vmatpush1.msra.mxu0 %v376
    %489 = vmatprep.subr.mxu0 %v381
    %490 = vmatpush1.msra.mxu0 %v380
    %491 = vmatprep.subr.mxu0 %v385
    %492 = vmatpush1.msra.mxu0 %v384
    %493 = vmatprep.subr.mxu0 %v389
    %494 = vmatpush1.msra.mxu0 %v388
    %495 = vmatprep.subr.mxu0 %v393
    %496 = vmatpush1.msra.mxu0 %v392
    %497 = vmatprep.subr.mxu0 0.0
    %498 = vmatpush1.msra.mxu0 0.0
    %499 = vmatprep.subr.mxu0 0.0
    %500 = vmatpush1.msra.mxu0 0.0
    %501 = vmatprep.subr.mxu0 0.0
    %502 = vmatpush1.msra.mxu0 0.0
    %503 = vmatprep.subr.mxu0 0.0
    %504 = vmatpush1.msra.mxu0 0.0
    %505 = vmatprep.subr.mxu0 0.0
    %506 = vmatpush1.msra.mxu0 0.0
    %507 = vmatprep.subr.mxu0 0.0
    %508 = vmatpush1.msra.mxu0 0.0
    %509 = vmatprep.subr.mxu0 0.0
    %510 = vmatpush1.msra.mxu0 0.0
    %511 = vmatprep.subr.mxu0 0.0
    %512 = vmatpush1.msra.mxu0 0.0
    %513 = vmatprep.subr.mxu0 0.0
    %514 = vmatpush1.msra.mxu0 0.0
    %515 = vmatprep.subr.mxu0 0.0
    %516 = vmatpush1.msra.mxu0 0.0
    %517 = vmatprep.subr.mxu0 0.0
    %518 = vmatpush1.msra.mxu0 0.0
    %519 = vmatprep.subr.mxu0 0.0
    %520 = vmatpush1.msra.mxu0 0.0
    %521 = vmatprep.subr.mxu0 0.0
    %522 = vmatpush1.msra.mxu0 0.0
    %523 = vmatprep.subr.mxu0 0.0
    %524 = vmatpush1.msra.mxu0 0.0
    %525 = vmatprep.subr.mxu0 0.0
    %526 = vmatpush1.msra.mxu0 0.0
    %527 = vmatprep.subr.mxu0 0.0
    %528 = vmatpush1.msra.mxu0 0.0
    %529 = vmatprep.mubr.f32.mxu0 0.0
    %530 = vmatmul.mubr.f32.gmra.mrb[0].mxu0 %v323
    %v531 = vpop.f32.mrb[0].mxu0
    %v532 = vadd.f32 0.0, %v531
    %v533 = vpop.f32.mrb[0].mxu0
    %v534 = vadd.f32 0.0, %v533
    %535 = vdwg.mxu0
    %v536 = vadd.f32 %v326, %v461
    %v537 = vadd.f32 %v327, %v463
    %v538 = vadd.f32 %v328, %v532
    %v539 = vadd.f32 %v329, %v534
    %v540 = vxor.u32 %v536, 2147483648
    %v541 = vmul.f32 %v540, 1.442695
    %v542 = vpow.pop %v541
    %v543 = vadd.f32 %v542, 1.0
    %v544 = vrcp.pop %v543
    %v545 = vmul.f32 1.0, %v544
    %v546 = vxor.u32 %v537, 2147483648
    %v547 = vmul.f32 %v546, 1.442695
    %v548 = vpow.pop %v547
    %v549 = vadd.f32 %v548, 1.0
    %v550 = vrcp.pop %v549
    %v551 = vmul.f32 1.0, %v550
    %v552 = vtanh.pop %v538
    %v553 = vxor.u32 %v539, 2147483648
    %v554 = vmul.f32 %v553, 1.442695
    %v555 = vpow.pop %v554
    %v556 = vadd.f32 %v555, 1.0
    %v557 = vrcp.pop %v556
    %v558 = vmul.f32 1.0, %v557
    %v559 = vmul.f32 %v551, %v324
    %v560 = vmul.f32 %v545, %v552
    %v561 = vadd.f32 %v559, %v560
    %v562 = vtanh.pop %v561
    %v563 = vmul.f32 %v558, %v562
    %564 = vst [vmem:[#allocation2] sm:$0xff] %v563
    %565 = vst [vmem:[#allocation3] sm:$0xff] %v561
    %s566 = scalar_lea.vmem [#allocation12], 8
    %567 = vst [vmem:[%s566] sm:$0xff] %v563
    %v568 = vld [vmem:[#allocation2] sm:$0xff]
    %v569 = vld [vmem:[#allocation3] sm:$0xff]
    %s570 = scalar_lea.vmem [#allocation4], 64
    %v571 = vld [vmem:[%s570] sm:$0xff]
    %v572 = vld [vmem:[%s570 + $0x8] sm:$0xff]
    %v573 = vld [vmem:[%s570 + $0x10] sm:$0xff]
    %v574 = vld [vmem:[%s570 + $0x18] sm:$0xff]
    %v575 = vld [vmem:[#allocation10] sm:$0xff]
    %v576 = vld [vmem:[#allocation10 + $0x8] sm:$0xff]
    %v577 = vld [vmem:[#allocation10 + $0x10] sm:$0xff]
    %v578 = vld [vmem:[#allocation10 + $0x18] sm:$0xff]
    %v579 = vld [vmem:[#allocation10 + $0x20] sm:$0xff]
    %v580 = vld [vmem:[#allocation10 + $0x28] sm:$0xff]
    %v581 = vld [vmem:[#allocation10 + $0x30] sm:$0xff]
    %v582 = vld [vmem:[#allocation10 + $0x38] sm:$0xff]
    %v583 = vld [vmem:[#allocation10 + $0x40] sm:$0xff]
    %v584 = vld [vmem:[#allocation10 + $0x48] sm:$0xff]
    %v585 = vld [vmem:[#allocation10 + $0x50] sm:$0xff]
    %v586 = vld [vmem:[#allocation10 + $0x58] sm:$0xff]
    %v587 = vld [vmem:[#allocation10 + $0x60] sm:$0xff]
    %v588 = vld [vmem:[#allocation10 + $0x68] sm:$0xff]
    %v589 = vld [vmem:[#allocation10 + $0x70] sm:$0xff]
    %v590 = vld [vmem:[#allocation10 + $0x78] sm:$0xff]
    %v591 = vld [vmem:[#allocation10 + $0x80] sm:$0xff]
    %v592 = vld [vmem:[#allocation10 + $0x88] sm:$0xff]
    %v593 = vld [vmem:[#allocation10 + $0x90] sm:$0xff]
    %v594 = vld [vmem:[#allocation10 + $0x98] sm:$0xff]
    %v595 = vld [vmem:[#allocation10 + $0xa0] sm:$0xff]
    %v596 = vld [vmem:[#allocation10 + $0xa8] sm:$0xff]
    %v597 = vld [vmem:[#allocation10 + $0xb0] sm:$0xff]
    %v598 = vld [vmem:[#allocation10 + $0xb8] sm:$0xff]
    %v599 = vld [vmem:[#allocation10 + $0xc0] sm:$0xff]
    %v600 = vld [vmem:[#allocation10 + $0xc8] sm:$0xff]
    %v601 = vld [vmem:[#allocation10 + $0xd0] sm:$0xff]
    %v602 = vld [vmem:[#allocation10 + $0xd8] sm:$0xff]
    %v603 = vld [vmem:[#allocation10 + $0xe0] sm:$0xff]
    %v604 = vld [vmem:[#allocation10 + $0xe8] sm:$0xff]
    %v605 = vld [vmem:[#allocation10 + $0xf0] sm:$0xff]
    %v606 = vld [vmem:[#allocation10 + $0xf8] sm:$0xff]
    %v607 = vld [vmem:[#allocation10 + $0x100] sm:$0xff]
    %v608 = vld [vmem:[#allocation10 + $0x108] sm:$0xff]
    %v609 = vld [vmem:[#allocation10 + $0x110] sm:$0xff]
    %v610 = vld [vmem:[#allocation10 + $0x118] sm:$0xff]
    %v611 = vld [vmem:[#allocation10 + $0x120] sm:$0xff]
    %v612 = vld [vmem:[#allocation10 + $0x128] sm:$0xff]
    %v613 = vld [vmem:[#allocation10 + $0x130] sm:$0xff]
    %v614 = vld [vmem:[#allocation10 + $0x138] sm:$0xff]
    %v615 = vld [vmem:[#allocation10 + $0x140] sm:$0xff]
    %v616 = vld [vmem:[#allocation10 + $0x148] sm:$0xff]
    %v617 = vld [vmem:[#allocation10 + $0x150] sm:$0xff]
    %v618 = vld [vmem:[#allocation10 + $0x158] sm:$0xff]
    %v619 = vld [vmem:[#allocation10 + $0x160] sm:$0xff]
    %v620 = vld [vmem:[#allocation10 + $0x168] sm:$0xff]
    %v621 = vld [vmem:[#allocation10 + $0x170] sm:$0xff]
    %v622 = vld [vmem:[#allocation10 + $0x178] sm:$0xff]
    %v623 = vld [vmem:[#allocation10 + $0x180] sm:$0xff]
    %v624 = vld [vmem:[#allocation10 + $0x188] sm:$0xff]
    %v625 = vld [vmem:[#allocation10 + $0x190] sm:$0xff]
    %v626 = vld [vmem:[#allocation10 + $0x198] sm:$0xff]
    %v627 = vld [vmem:[#allocation10 + $0x1a0] sm:$0xff]
    %v628 = vld [vmem:[#allocation10 + $0x1a8] sm:$0xff]
    %v629 = vld [vmem:[#allocation10 + $0x1b0] sm:$0xff]
    %v630 = vld [vmem:[#allocation10 + $0x1b8] sm:$0xff]
    %v631 = vld [vmem:[#allocation10 + $0x1c0] sm:$0xff]
    %v632 = vld [vmem:[#allocation10 + $0x1c8] sm:$0xff]
    %v633 = vld [vmem:[#allocation10 + $0x1d0] sm:$0xff]
    %v634 = vld [vmem:[#allocation10 + $0x1d8] sm:$0xff]
    %v635 = vld [vmem:[#allocation10 + $0x1e0] sm:$0xff]
    %v636 = vld [vmem:[#allocation10 + $0x1e8] sm:$0xff]
    %v637 = vld [vmem:[#allocation10 + $0x1f0] sm:$0xff]
    %v638 = vld [vmem:[#allocation10 + $0x1f8] sm:$0xff]
    %639 = vmatprep.subr.mxu0 %v576
    %640 = vmatpush1.msra.mxu0 %v575
    %641 = vmatprep.subr.mxu0 %v580
    %642 = vmatpush1.msra.mxu0 %v579
    %643 = vmatprep.subr.mxu0 %v584
    %644 = vmatpush1.msra.mxu0 %v583
    %645 = vmatprep.subr.mxu0 %v588
    %646 = vmatpush1.msra.mxu0 %v587
    %647 = vmatprep.subr.mxu0 %v592
    %648 = vmatpush1.msra.mxu0 %v591
    %649 = vmatprep.subr.mxu0 %v596
    %650 = vmatpush1.msra.mxu0 %v595
    %651 = vmatprep.subr.mxu0 %v600
    %652 = vmatpush1.msra.mxu0 %v599
    %653 = vmatprep.subr.mxu0 %v604
    %654 = vmatpush1.msra.mxu0 %v603
    %655 = vmatprep.subr.mxu0 %v608
    %656 = vmatpush1.msra.mxu0 %v607
    %657 = vmatprep.subr.mxu0 %v612
    %658 = vmatpush1.msra.mxu0 %v611
    %659 = vmatprep.subr.mxu0 %v616
    %660 = vmatpush1.msra.mxu0 %v615
    %661 = vmatprep.subr.mxu0 %v620
    %662 = vmatpush1.msra.mxu0 %v619
    %663 = vmatprep.subr.mxu0 %v624
    %664 = vmatpush1.msra.mxu0 %v623
    %665 = vmatprep.subr.mxu0 %v628
    %666 = vmatpush1.msra.mxu0 %v627
    %667 = vmatprep.subr.mxu0 %v632
    %668 = vmatpush1.msra.mxu0 %v631
    %669 = vmatprep.subr.mxu0 %v636
    %670 = vmatpush1.msra.mxu0 %v635
    %671 = vmatprep.subr.mxu0 0.0
    %672 = vmatpush1.msra.mxu0 0.0
    %673 = vmatprep.subr.mxu0 0.0
    %674 = vmatpush1.msra.mxu0 0.0
    %675 = vmatprep.subr.mxu0 0.0
    %676 = vmatpush1.msra.mxu0 0.0
    %677 = vmatprep.subr.mxu0 0.0
    %678 = vmatpush1.msra.mxu0 0.0
    %679 = vmatprep.subr.mxu0 0.0
    %680 = vmatpush1.msra.mxu0 0.0
    %681 = vmatprep.subr.mxu0 0.0
    %682 = vmatpush1.msra.mxu0 0.0
    %683 = vmatprep.subr.mxu0 0.0
    %684 = vmatpush1.msra.mxu0 0.0
    %685 = vmatprep.subr.mxu0 0.0
    %686 = vmatpush1.msra.mxu0 0.0
    %687 = vmatprep.subr.mxu0 0.0
    %688 = vmatpush1.msra.mxu0 0.0
    %689 = vmatprep.subr.mxu0 0.0
    %690 = vmatpush1.msra.mxu0 0.0
    %691 = vmatprep.subr.mxu0 0.0
    %692 = vmatpush1.msra.mxu0 0.0
    %693 = vmatprep.subr.mxu0 0.0
    %694 = vmatpush1.msra.mxu0 0.0
    %695 = vmatprep.subr.mxu0 0.0
    %696 = vmatpush1.msra.mxu0 0.0
    %697 = vmatprep.subr.mxu0 0.0
    %698 = vmatpush1.msra.mxu0 0.0
    %699 = vmatprep.subr.mxu0 0.0
    %700 = vmatpush1.msra.mxu0 0.0
    %701 = vmatprep.subr.mxu0 0.0
    %702 = vmatpush1.msra.mxu0 0.0
    %703 = vmatprep.mubr.f32.mxu0 0.0
    %704 = vmatmul.mubr.f32.gmra.mrb[0].mxu0 %v568
    %v705 = vpop.f32.mrb[0].mxu0
    %v706 = vadd.f32 0.0, %v705
    %v707 = vpop.f32.mrb[0].mxu0
    %v708 = vadd.f32 0.0, %v707
    %709 = vdwg.mxu0
    %710 = vmatprep.subr.mxu0 %v578
    %711 = vmatpush1.msra.mxu0 %v577
    %712 = vmatprep.subr.mxu0 %v582
    %713 = vmatpush1.msra.mxu0 %v581
    %714 = vmatprep.subr.mxu0 %v586
    %715 = vmatpush1.msra.mxu0 %v585
    %716 = vmatprep.subr.mxu0 %v590
    %717 = vmatpush1.msra.mxu0 %v589
    %718 = vmatprep.subr.mxu0 %v594
    %719 = vmatpush1.msra.mxu0 %v593
    %720 = vmatprep.subr.mxu0 %v598
    %721 = vmatpush1.msra.mxu0 %v597
    %722 = vmatprep.subr.mxu0 %v602
    %723 = vmatpush1.msra.mxu0 %v601
    %724 = vmatprep.subr.mxu0 %v606
    %725 = vmatpush1.msra.mxu0 %v605
    %726 = vmatprep.subr.mxu0 %v610
    %727 = vmatpush1.msra.mxu0 %v609
    %728 = vmatprep.subr.mxu0 %v614
    %729 = vmatpush1.msra.mxu0 %v613
    %730 = vmatprep.subr.mxu0 %v618
    %731 = vmatpush1.msra.mxu0 %v617
    %732 = vmatprep.subr.mxu0 %v622
    %733 = vmatpush1.msra.mxu0 %v621
    %734 = vmatprep.subr.mxu0 %v626
    %735 = vmatpush1.msra.mxu0 %v625
    %736 = vmatprep.subr.mxu0 %v630
    %737 = vmatpush1.msra.mxu0 %v629
    %738 = vmatprep.subr.mxu0 %v634
    %739 = vmatpush1.msra.mxu0 %v633
    %740 = vmatprep.subr.mxu0 %v638
    %741 = vmatpush1.msra.mxu0 %v637
    %742 = vmatprep.subr.mxu0 0.0
    %743 = vmatpush1.msra.mxu0 0.0
    %744 = vmatprep.subr.mxu0 0.0
    %745 = vmatpush1.msra.mxu0 0.0
    %746 = vmatprep.subr.mxu0 0.0
    %747 = vmatpush1.msra.mxu0 0.0
    %748 = vmatprep.subr.mxu0 0.0
    %749 = vmatpush1.msra.mxu0 0.0
    %750 = vmatprep.subr.mxu0 0.0
    %751 = vmatpush1.msra.mxu0 0.0
    %752 = vmatprep.subr.mxu0 0.0
    %753 = vmatpush1.msra.mxu0 0.0
    %754 = vmatprep.subr.mxu0 0.0
    %755 = vmatpush1.msra.mxu0 0.0
    %756 = vmatprep.subr.mxu0 0.0
    %757 = vmatpush1.msra.mxu0 0.0
    %758 = vmatprep.subr.mxu0 0.0
    %759 = vmatpush1.msra.mxu0 0.0
    %760 = vmatprep.subr.mxu0 0.0
    %761 = vmatpush1.msra.mxu0 0.0
    %762 = vmatprep.subr.mxu0 0.0
    %763 = vmatpush1.msra.mxu0 0.0
    %764 = vmatprep.subr.mxu0 0.0
    %765 = vmatpush1.msra.mxu0 0.0
    %766 = vmatprep.subr.mxu0 0.0
    %767 = vmatpush1.msra.mxu0 0.0
    %768 = vmatprep.subr.mxu0 0.0
    %769 = vmatpush1.msra.mxu0 0.0
    %770 = vmatprep.subr.mxu0 0.0
    %771 = vmatpush1.msra.mxu0 0.0
    %772 = vmatprep.subr.mxu0 0.0
    %773 = vmatpush1.msra.mxu0 0.0
    %774 = vmatprep.mubr.f32.mxu0 0.0
    %775 = vmatmul.mubr.f32.gmra.mrb[0].mxu0 %v568
    %v776 = vpop.f32.mrb[0].mxu0
    %v777 = vadd.f32 0.0, %v776
    %v778 = vpop.f32.mrb[0].mxu0
    %v779 = vadd.f32 0.0, %v778
    %780 = vdwg.mxu0
    %v781 = vadd.f32 %v571, %v706
    %v782 = vadd.f32 %v572, %v708
    %v783 = vadd.f32 %v573, %v777
    %v784 = vadd.f32 %v574, %v779
    %v785 = vxor.u32 %v781, 2147483648
    %v786 = vmul.f32 %v785, 1.442695
    %v787 = vpow.pop %v786
    %v788 = vadd.f32 %v787, 1.0
    %v789 = vrcp.pop %v788
    %v790 = vmul.f32 1.0, %v789
    %v791 = vxor.u32 %v782, 2147483648
    %v792 = vmul.f32 %v791, 1.442695
    %v793 = vpow.pop %v792
    %v794 = vadd.f32 %v793, 1.0
    %v795 = vrcp.pop %v794
    %v796 = vmul.f32 1.0, %v795
    %v797 = vtanh.pop %v783
    %v798 = vxor.u32 %v784, 2147483648
    %v799 = vmul.f32 %v798, 1.442695
    %v800 = vpow.pop %v799
    %v801 = vadd.f32 %v800, 1.0
    %v802 = vrcp.pop %v801
    %v803 = vmul.f32 1.0, %v802
    %v804 = vmul.f32 %v796, %v569
    %v805 = vmul.f32 %v790, %v797
    %v806 = vadd.f32 %v804, %v805
    %v807 = vtanh.pop %v806
    %v808 = vmul.f32 %v803, %v807
    %809 = vst [vmem:[#allocation2] sm:$0xff] %v808
    %810 = vst [vmem:[#allocation3] sm:$0xff] %v806
    %s811 = scalar_lea.vmem [#allocation12], 16
    %812 = vst [vmem:[%s811] sm:$0xff] %v808
    %v813 = vld [vmem:[#allocation2] sm:$0xff]
    %v814 = vld [vmem:[#allocation3] sm:$0xff]
    %s815 = scalar_lea.vmem [#allocation4], 96
    %v816 = vld [vmem:[%s815] sm:$0xff]
    %v817 = vld [vmem:[%s815 + $0x8] sm:$0xff]
    %v818 = vld [vmem:[%s815 + $0x10] sm:$0xff]
    %v819 = vld [vmem:[%s815 + $0x18] sm:$0xff]
    %v820 = vld [vmem:[#allocation10] sm:$0xff]
    %v821 = vld [vmem:[#allocation10 + $0x8] sm:$0xff]
    %v822 = vld [vmem:[#allocation10 + $0x10] sm:$0xff]
    %v823 = vld [vmem:[#allocation10 + $0x18] sm:$0xff]
    %v824 = vld [vmem:[#allocation10 + $0x20] sm:$0xff]
    %v825 = vld [vmem:[#allocation10 + $0x28] sm:$0xff]
    %v826 = vld [vmem:[#allocation10 + $0x30] sm:$0xff]
    %v827 = vld [vmem:[#allocation10 + $0x38] sm:$0xff]
    %v828 = vld [vmem:[#allocation10 + $0x40] sm:$0xff]
    %v829 = vld [vmem:[#allocation10 + $0x48] sm:$0xff]
    %v830 = vld [vmem:[#allocation10 + $0x50] sm:$0xff]
    %v831 = vld [vmem:[#allocation10 + $0x58] sm:$0xff]
    %v832 = vld [vmem:[#allocation10 + $0x60] sm:$0xff]
    %v833 = vld [vmem:[#allocation10 + $0x68] sm:$0xff]
    %v834 = vld [vmem:[#allocation10 + $0x70] sm:$0xff]
    %v835 = vld [vmem:[#allocation10 + $0x78] sm:$0xff]
    %v836 = vld [vmem:[#allocation10 + $0x80] sm:$0xff]
    %v837 = vld [vmem:[#allocation10 + $0x88] sm:$0xff]
    %v838 = vld [vmem:[#allocation10 + $0x90] sm:$0xff]
    %v839 = vld [vmem:[#allocation10 + $0x98] sm:$0xff]
    %v840 = vld [vmem:[#allocation10 + $0xa0] sm:$0xff]
    %v841 = vld [vmem:[#allocation10 + $0xa8] sm:$0xff]
    %v842 = vld [vmem:[#allocation10 + $0xb0] sm:$0xff]
    %v843 = vld [vmem:[#allocation10 + $0xb8] sm:$0xff]
    %v844 = vld [vmem:[#allocation10 + $0xc0] sm:$0xff]
    %v845 = vld [vmem:[#allocation10 + $0xc8] sm:$0xff]
    %v846 = vld [vmem:[#allocation10 + $0xd0] sm:$0xff]
    %v847 = vld [vmem:[#allocation10 + $0xd8] sm:$0xff]
    %v848 = vld [vmem:[#allocation10 + $0xe0] sm:$0xff]
    %v849 = vld [vmem:[#allocation10 + $0xe8] sm:$0xff]
    %v850 = vld [vmem:[#allocation10 + $0xf0] sm:$0xff]
    %v851 = vld [vmem:[#allocation10 + $0xf8] sm:$0xff]
    %v852 = vld [vmem:[#allocation10 + $0x100] sm:$0xff]
    %v853 = vld [vmem:[#allocation10 + $0x108] sm:$0xff]
    %v854 = vld [vmem:[#allocation10 + $0x110] sm:$0xff]
    %v855 = vld [vmem:[#allocation10 + $0x118] sm:$0xff]
    %v856 = vld [vmem:[#allocation10 + $0x120] sm:$0xff]
    %v857 = vld [vmem:[#allocation10 + $0x128] sm:$0xff]
    %v858 = vld [vmem:[#allocation10 + $0x130] sm:$0xff]
    %v859 = vld [vmem:[#allocation10 + $0x138] sm:$0xff]
    %v860 = vld [vmem:[#allocation10 + $0x140] sm:$0xff]
    %v861 = vld [vmem:[#allocation10 + $0x148] sm:$0xff]
    %v862 = vld [vmem:[#allocation10 + $0x150] sm:$0xff]
    %v863 = vld [vmem:[#allocation10 + $0x158] sm:$0xff]
    %v864 = vld [vmem:[#allocation10 + $0x160] sm:$0xff]
    %v865 = vld [vmem:[#allocation10 + $0x168] sm:$0xff]
    %v866 = vld [vmem:[#allocation10 + $0x170] sm:$0xff]
    %v867 = vld [vmem:[#allocation10 + $0x178] sm:$0xff]
    %v868 = vld [vmem:[#allocation10 + $0x180] sm:$0xff]
    %v869 = vld [vmem:[#allocation10 + $0x188] sm:$0xff]
    %v870 = vld [vmem:[#allocation10 + $0x190] sm:$0xff]
    %v871 = vld [vmem:[#allocation10 + $0x198] sm:$0xff]
    %v872 = vld [vmem:[#allocation10 + $0x1a0] sm:$0xff]
    %v873 = vld [vmem:[#allocation10 + $0x1a8] sm:$0xff]
    %v874 = vld [vmem:[#allocation10 + $0x1b0] sm:$0xff]
    %v875 = vld [vmem:[#allocation10 + $0x1b8] sm:$0xff]
    %v876 = vld [vmem:[#allocation10 + $0x1c0] sm:$0xff]
    %v877 = vld [vmem:[#allocation10 + $0x1c8] sm:$0xff]
    %v878 = vld [vmem:[#allocation10 + $0x1d0] sm:$0xff]
    %v879 = vld [vmem:[#allocation10 + $0x1d8] sm:$0xff]
    %v880 = vld [vmem:[#allocation10 + $0x1e0] sm:$0xff]
    %v881 = vld [vmem:[#allocation10 + $0x1e8] sm:$0xff]
    %v882 = vld [vmem:[#allocation10 + $0x1f0] sm:$0xff]
    %v883 = vld [vmem:[#allocation10 + $0x1f8] sm:$0xff]
    %884 = vmatprep.subr.mxu0 %v821
    %885 = vmatpush1.msra.mxu0 %v820
    %886 = vmatprep.subr.mxu0 %v825
    %887 = vmatpush1.msra.mxu0 %v824
    %888 = vmatprep.subr.mxu0 %v829
    %889 = vmatpush1.msra.mxu0 %v828
    %890 = vmatprep.subr.mxu0 %v833
    %891 = vmatpush1.msra.mxu0 %v832
    %892 = vmatprep.subr.mxu0 %v837
    %893 = vmatpush1.msra.mxu0 %v836
    %894 = vmatprep.subr.mxu0 %v841
    %895 = vmatpush1.msra.mxu0 %v840
    %896 = vmatprep.subr.mxu0 %v845
    %897 = vmatpush1.msra.mxu0 %v844
    %898 = vmatprep.subr.mxu0 %v849
    %899 = vmatpush1.msra.mxu0 %v848
    %900 = vmatprep.subr.mxu0 %v853
    %901 = vmatpush1.msra.mxu0 %v852
    %902 = vmatprep.subr.mxu0 %v857
    %903 = vmatpush1.msra.mxu0 %v856
    %904 = vmatprep.subr.mxu0 %v861
    %905 = vmatpush1.msra.mxu0 %v860
    %906 = vmatprep.subr.mxu0 %v865
    %907 = vmatpush1.msra.mxu0 %v864
    %908 = vmatprep.subr.mxu0 %v869
    %909 = vmatpush1.msra.mxu0 %v868
    %910 = vmatprep.subr.mxu0 %v873
    %911 = vmatpush1.msra.mxu0 %v872
    %912 = vmatprep.subr.mxu0 %v877
    %913 = vmatpush1.msra.mxu0 %v876
    %914 = vmatprep.subr.mxu0 %v881
    %915 = vmatpush1.msra.mxu0 %v880
    %916 = vmatprep.subr.mxu0 0.0
    %917 = vmatpush1.msra.mxu0 0.0
    %918 = vmatprep.subr.mxu0 0.0
    %919 = vmatpush1.msra.mxu0 0.0
    %920 = vmatprep.subr.mxu0 0.0
    %921 = vmatpush1.msra.mxu0 0.0
    %922 = vmatprep.subr.mxu0 0.0
    %923 = vmatpush1.msra.mxu0 0.0
    %924 = vmatprep.subr.mxu0 0.0
    %925 = vmatpush1.msra.mxu0 0.0
    %926 = vmatprep.subr.mxu0 0.0
    %927 = vmatpush1.msra.mxu0 0.0
    %928 = vmatprep.subr.mxu0 0.0
    %929 = vmatpush1.msra.mxu0 0.0
    %930 = vmatprep.subr.mxu0 0.0
    %931 = vmatpush1.msra.mxu0 0.0
    %932 = vmatprep.subr.mxu0 0.0
    %933 = vmatpush1.msra.mxu0 0.0
    %934 = vmatprep.subr.mxu0 0.0
    %935 = vmatpush1.msra.mxu0 0.0
    %936 = vmatprep.subr.mxu0 0.0
    %937 = vmatpush1.msra.mxu0 0.0
    %938 = vmatprep.subr.mxu0 0.0
    %939 = vmatpush1.msra.mxu0 0.0
    %940 = vmatprep.subr.mxu0 0.0
    %941 = vmatpush1.msra.mxu0 0.0
    %942 = vmatprep.subr.mxu0 0.0
    %943 = vmatpush1.msra.mxu0 0.0
    %944 = vmatprep.subr.mxu0 0.0
    %945 = vmatpush1.msra.mxu0 0.0
    %946 = vmatprep.subr.mxu0 0.0
    %947 = vmatpush1.msra.mxu0 0.0
    %948 = vmatprep.mubr.f32.mxu0 0.0
    %949 = vmatmul.mubr.f32.gmra.mrb[0].mxu0 %v813
    %v950 = vpop.f32.mrb[0].mxu0
    %v951 = vadd.f32 0.0, %v950
    %v952 = vpop.f32.mrb[0].mxu0
    %v953 = vadd.f32 0.0, %v952
    %954 = vdwg.mxu0
    %955 = vmatprep.subr.mxu0 %v823
    %956 = vmatpush1.msra.mxu0 %v822
    %957 = vmatprep.subr.mxu0 %v827
    %958 = vmatpush1.msra.mxu0 %v826
    %959 = vmatprep.subr.mxu0 %v831
    %960 = vmatpush1.msra.mxu0 %v830
    %961 = vmatprep.subr.mxu0 %v835
    %962 = vmatpush1.msra.mxu0 %v834
    %963 = vmatprep.subr.mxu0 %v839
    %964 = vmatpush1.msra.mxu0 %v838
    %965 = vmatprep.subr.mxu0 %v843
    %966 = vmatpush1.msra.mxu0 %v842
    %967 = vmatprep.subr.mxu0 %v847
    %968 = vmatpush1.msra.mxu0 %v846
    %969 = vmatprep.subr.mxu0 %v851
    %970 = vmatpush1.msra.mxu0 %v850
    %971 = vmatprep.subr.mxu0 %v855
    %972 = vmatpush1.msra.mxu0 %v854
    %973 = vmatprep.subr.mxu0 %v859
    %974 = vmatpush1.msra.mxu0 %v858
    %975 = vmatprep.subr.mxu0 %v863
    %976 = vmatpush1.msra.mxu0 %v862
    %977 = vmatprep.subr.mxu0 %v867
    %978 = vmatpush1.msra.mxu0 %v866
    %979 = vmatprep.subr.mxu0 %v871
    %980 = vmatpush1.msra.mxu0 %v870
    %981 = vmatprep.subr.mxu0 %v875
    %982 = vmatpush1.msra.mxu0 %v874
    %983 = vmatprep.subr.mxu0 %v879
    %984 = vmatpush1.msra.mxu0 %v878
    %985 = vmatprep.subr.mxu0 %v883
    %986 = vmatpush1.msra.mxu0 %v882
    %987 = vmatprep.subr.mxu0 0.0
    %988 = vmatpush1.msra.mxu0 0.0
    %989 = vmatprep.subr.mxu0 0.0
    %990 = vmatpush1.msra.mxu0 0.0
    %991 = vmatprep.subr.mxu0 0.0
    %992 = vmatpush1.msra.mxu0 0.0
    %993 = vmatprep.subr.mxu0 0.0
    %994 = vmatpush1.msra.mxu0 0.0
    %995 = vmatprep.subr.mxu0 0.0
    %996 = vmatpush1.msra.mxu0 0.0
    %997 = vmatprep.subr.mxu0 0.0
    %998 = vmatpush1.msra.mxu0 0.0
    %999 = vmatprep.subr.mxu0 0.0
    %1000 = vmatpush1.msra.mxu0 0.0
    %1001 = vmatprep.subr.mxu0 0.0
    %1002 = vmatpush1.msra.mxu0 0.0
    %1003 = vmatprep.subr.mxu0 0.0
    %1004 = vmatpush1.msra.mxu0 0.0
    %1005 = vmatprep.subr.mxu0 0.0
    %1006 = vmatpush1.msra.mxu0 0.0
    %1007 = vmatprep.subr.mxu0 0.0
    %1008 = vmatpush1.msra.mxu0 0.0
    %1009 = vmatprep.subr.mxu0 0.0
    %1010 = vmatpush1.msra.mxu0 0.0
    %1011 = vmatprep.subr.mxu0 0.0
    %1012 = vmatpush1.msra.mxu0 0.0
    %1013 = vmatprep.subr.mxu0 0.0
    %1014 = vmatpush1.msra.mxu0 0.0
    %1015 = vmatprep.subr.mxu0 0.0
    %1016 = vmatpush1.msra.mxu0 0.0
    %1017 = vmatprep.subr.mxu0 0.0
    %1018 = vmatpush1.msra.mxu0 0.0
    %1019 = vmatprep.mubr.f32.mxu0 0.0
    %1020 = vmatmul.mubr.f32.gmra.mrb[0].mxu0 %v813
    %v1021 = vpop.f32.mrb[0].mxu0
    %v1022 = vadd.f32 0.0, %v1021
    %v1023 = vpop.f32.mrb[0].mxu0
    %v1024 = vadd.f32 0.0, %v1023
    %1025 = vdwg.mxu0
    %v1026 = vadd.f32 %v816, %v951
    %v1027 = vadd.f32 %v817, %v953
    %v1028 = vadd.f32 %v818, %v1022
    %v1029 = vadd.f32 %v819, %v1024
    %v1030 = vxor.u32 %v1026, 2147483648
    %v1031 = vmul.f32 %v1030, 1.442695
    %v1032 = vpow.pop %v1031
    %v1033 = vadd.f32 %v1032, 1.0
    %v1034 = vrcp.pop %v1033
    %v1035 = vmul.f32 1.0, %v1034
    %v1036 = vxor.u32 %v1027, 2147483648
    %v1037 = vmul.f32 %v1036, 1.442695
    %v1038 = vpow.pop %v1037
    %v1039 = vadd.f32 %v1038, 1.0
    %v1040 = vrcp.pop %v1039
    %v1041 = vmul.f32 1.0, %v1040
    %v1042 = vtanh.pop %v1028
    %v1043 = vxor.u32 %v1029, 2147483648
    %v1044 = vmul.f32 %v1043, 1.442695
    %v1045 = vpow.pop %v1044
    %v1046 = vadd.f32 %v1045, 1.0
    %v1047 = vrcp.pop %v1046
    %v1048 = vmul.f32 1.0, %v1047
    %v1049 = vmul.f32 %v1041, %v814
    %v1050 = vmul.f32 %v1035, %v1042
    %v1051 = vadd.f32 %v1049, %v1050
    %v1052 = vtanh.pop %v1051
    %v1053 = vmul.f32 %v1048, %v1052
    %1054 = vst [vmem:[#allocation2] sm:$0xff] %v1053
    %1055 = vst [vmem:[#allocation3] sm:$0xff] %v1051
    %s1056 = scalar_lea.vmem [#allocation12], 24
    %1057 = vst [vmem:[%s1056] sm:$0xff] %v1053
    %v1058 = vld [vmem:[#allocation2] sm:$0xff]
    %v1059 = vld [vmem:[#allocation3] sm:$0xff]
    %s1060 = scalar_lea.vmem [#allocation4], 128
    %v1061 = vld [vmem:[%s1060] sm:$0xff]
    %v1062 = vld [vmem:[%s1060 + $0x8] sm:$0xff]
    %v1063 = vld [vmem:[%s1060 + $0x10] sm:$0xff]
    %v1064 = vld [vmem:[%s1060 + $0x18] sm:$0xff]
    %v1065 = vld [vmem:[#allocation10] sm:$0xff]
    %v1066 = vld [vmem:[#allocation10 + $0x8] sm:$0xff]
    %v1067 = vld [vmem:[#allocation10 + $0x10] sm:$0xff]
    %v1068 = vld [vmem:[#allocation10 + $0x18] sm:$0xff]
    %v1069 = vld [vmem:[#allocation10 + $0x20] sm:$0xff]
    %v1070 = vld [vmem:[#allocation10 + $0x28] sm:$0xff]
    %v1071 = vld [vmem:[#allocation10 + $0x30] sm:$0xff]
    %v1072 = vld [vmem:[#allocation10 + $0x38] sm:$0xff]
    %v1073 = vld [vmem:[#allocation10 + $0x40] sm:$0xff]
    %v1074 = vld [vmem:[#allocation10 + $0x48] sm:$0xff]
    %v1075 = vld [vmem:[#allocation10 + $0x50] sm:$0xff]
    %v1076 = vld [vmem:[#allocation10 + $0x58] sm:$0xff]
    %v1077 = vld [vmem:[#allocation10 + $0x60] sm:$0xff]
    %v1078 = vld [vmem:[#allocation10 + $0x68] sm:$0xff]
    %v1079 = vld [vmem:[#allocation10 + $0x70] sm:$0xff]
    %v1080 = vld [vmem:[#allocation10 + $0x78] sm:$0xff]
    %v1081 = vld [vmem:[#allocation10 + $0x80] sm:$0xff]
    %v1082 = vld [vmem:[#allocation10 + $0x88] sm:$0xff]
    %v1083 = vld [vmem:[#allocation10 + $0x90] sm:$0xff]
    %v1084 = vld [vmem:[#allocation10 + $0x98] sm:$0xff]
    %v1085 = vld [vmem:[#allocation10 + $0xa0] sm:$0xff]
    %v1086 = vld [vmem:[#allocation10 + $0xa8] sm:$0xff]
    %v1087 = vld [vmem:[#allocation10 + $0xb0] sm:$0xff]
    %v1088 = vld [vmem:[#allocation10 + $0xb8] sm:$0xff]
    %v1089 = vld [vmem:[#allocation10 + $0xc0] sm:$0xff]
    %v1090 = vld [vmem:[#allocation10 + $0xc8] sm:$0xff]
    %v1091 = vld [vmem:[#allocation10 + $0xd0] sm:$0xff]
    %v1092 = vld [vmem:[#allocation10 + $0xd8] sm:$0xff]
    %v1093 = vld [vmem:[#allocation10 + $0xe0] sm:$0xff]
    %v1094 = vld [vmem:[#allocation10 + $0xe8] sm:$0xff]
    %v1095 = vld [vmem:[#allocation10 + $0xf0] sm:$0xff]
    %v1096 = vld [vmem:[#allocation10 + $0xf8] sm:$0xff]
    %v1097 = vld [vmem:[#allocation10 + $0x100] sm:$0xff]
    %v1098 = vld [vmem:[#allocation10 + $0x108] sm:$0xff]
    %v1099 = vld [vmem:[#allocation10 + $0x110] sm:$0xff]
    %v1100 = vld [vmem:[#allocation10 + $0x118] sm:$0xff]
    %v1101 = vld [vmem:[#allocation10 + $0x120] sm:$0xff]
    %v1102 = vld [vmem:[#allocation10 + $0x128] sm:$0xff]
    %v1103 = vld [vmem:[#allocation10 + $0x130] sm:$0xff]
    %v1104 = vld [vmem:[#allocation10 + $0x138] sm:$0xff]
    %v1105 = vld [vmem:[#allocation10 + $0x140] sm:$0xff]
    %v1106 = vld [vmem:[#allocation10 + $0x148] sm:$0xff]
    %v1107 = vld [vmem:[#allocation10 + $0x150] sm:$0xff]
    %v1108 = vld [vmem:[#allocation10 + $0x158] sm:$0xff]
    %v1109 = vld [vmem:[#allocation10 + $0x160] sm:$0xff]
    %v1110 = vld [vmem:[#allocation10 + $0x168] sm:$0xff]
    %v1111 = vld [vmem:[#allocation10 + $0x170] sm:$0xff]
    %v1112 = vld [vmem:[#allocation10 + $0x178] sm:$0xff]
    %v1113 = vld [vmem:[#allocation10 + $0x180] sm:$0xff]
    %v1114 = vld [vmem:[#allocation10 + $0x188] sm:$0xff]
    %v1115 = vld [vmem:[#allocation10 + $0x190] sm:$0xff]
    %v1116 = vld [vmem:[#allocation10 + $0x198] sm:$0xff]
    %v1117 = vld [vmem:[#allocation10 + $0x1a0] sm:$0xff]
    %v1118 = vld [vmem:[#allocation10 + $0x1a8] sm:$0xff]
    %v1119 = vld [vmem:[#allocation10 + $0x1b0] sm:$0xff]
    %v1120 = vld [vmem:[#allocation10 + $0x1b8] sm:$0xff]
    %v1121 = vld [vmem:[#allocation10 + $0x1c0] sm:$0xff]
    %v1122 = vld [vmem:[#allocation10 + $0x1c8] sm:$0xff]
    %v1123 = vld [vmem:[#allocation10 + $0x1d0] sm:$0xff]
    %v1124 = vld [vmem:[#allocation10 + $0x1d8] sm:$0xff]
    %v1125 = vld [vmem:[#allocation10 + $0x1e0] sm:$0xff]
    %v1126 = vld [vmem:[#allocation10 + $0x1e8] sm:$0xff]
    %v1127 = vld [vmem:[#allocation10 + $0x1f0] sm:$0xff]
    %v1128 = vld [vmem:[#allocation10 + $0x1f8] sm:$0xff]
    %1129 = vmatprep.subr.mxu0 %v1066
    %1130 = vmatpush1.msra.mxu0 %v1065
    %1131 = vmatprep.subr.mxu0 %v1070
    %1132 = vmatpush1.msra.mxu0 %v1069
    %1133 = vmatprep.subr.mxu0 %v1074
    %1134 = vmatpush1.msra.mxu0 %v1073
    %1135 = vmatprep.subr.mxu0 %v1078
    %1136 = vmatpush1.msra.mxu0 %v1077
    %1137 = vmatprep.subr.mxu0 %v1082
    %1138 = vmatpush1.msra.mxu0 %v1081
    %1139 = vmatprep.subr.mxu0 %v1086
    %1140 = vmatpush1.msra.mxu0 %v1085
    %1141 = vmatprep.subr.mxu0 %v1090
    %1142 = vmatpush1.msra.mxu0 %v1089
    %1143 = vmatprep.subr.mxu0 %v1094
    %1144 = vmatpush1.msra.mxu0 %v1093
    %1145 = vmatprep.subr.mxu0 %v1098
    %1146 = vmatpush1.msra.mxu0 %v1097
    %1147 = vmatprep.subr.mxu0 %v1102
    %1148 = vmatpush1.msra.mxu0 %v1101
    %1149 = vmatprep.subr.mxu0 %v1106
    %1150 = vmatpush1.msra.mxu0 %v1105
    %1151 = vmatprep.subr.mxu0 %v1110
    %1152 = vmatpush1.msra.mxu0 %v1109
    %1153 = vmatprep.subr.mxu0 %v1114
    %1154 = vmatpush1.msra.mxu0 %v1113
    %1155 = vmatprep.subr.mxu0 %v1118
    %1156 = vmatpush1.msra.mxu0 %v1117
    %1157 = vmatprep.subr.mxu0 %v1122
    %1158 = vmatpush1.msra.mxu0 %v1121
    %1159 = vmatprep.subr.mxu0 %v1126
    %1160 = vmatpush1.msra.mxu0 %v1125
    %1161 = vmatprep.subr.mxu0 0.0
    %1162 = vmatpush1.msra.mxu0 0.0
    %1163 = vmatprep.subr.mxu0 0.0
    %1164 = vmatpush1.msra.mxu0 0.0
    %1165 = vmatprep.subr.mxu0 0.0
    %1166 = vmatpush1.msra.mxu0 0.0
    %1167 = vmatprep.subr.mxu0 0.0
    %1168 = vmatpush1.msra.mxu0 0.0
    %1169 = vmatprep.subr.mxu0 0.0
    %1170 = vmatpush1.msra.mxu0 0.0
    %1171 = vmatprep.subr.mxu0 0.0
    %1172 = vmatpush1.msra.mxu0 0.0
    %1173 = vmatprep.subr.mxu0 0.0
    %1174 = vmatpush1.msra.mxu0 0.0
    %1175 = vmatprep.subr.mxu0 0.0
    %1176 = vmatpush1.msra.mxu0 0.0
    %1177 = vmatprep.subr.mxu0 0.0
    %1178 = vmatpush1.msra.mxu0 0.0
    %1179 = vmatprep.subr.mxu0 0.0
    %1180 = vmatpush1.msra.mxu0 0.0
    %1181 = vmatprep.subr.mxu0 0.0
    %1182 = vmatpush1.msra.mxu0 0.0
    %1183 = vmatprep.subr.mxu0 0.0
    %1184 = vmatpush1.msra.mxu0 0.0
    %1185 = vmatprep.subr.mxu0 0.0
    %1186 = vmatpush1.msra.mxu0 0.0
    %1187 = vmatprep.subr.mxu0 0.0
    %1188 = vmatpush1.msra.mxu0 0.0
    %1189 = vmatprep.subr.mxu0 0.0
    %1190 = vmatpush1.msra.mxu0 0.0
    %1191 = vmatprep.subr.mxu0 0.0
    %1192 = vmatpush1.msra.mxu0 0.0
    %1193 = vmatprep.mubr.f32.mxu0 0.0
    %1194 = vmatmul.mubr.f32.gmra.mrb[0].mxu0 %v1058
    %v1195 = vpop.f32.mrb[0].mxu0
    %v1196 = vadd.f32 0.0, %v1195
    %v1197 = vpop.f32.mrb[0].mxu0
    %v1198 = vadd.f32 0.0, %v1197
    %1199 = vdwg.mxu0
    %1200 = vmatprep.subr.mxu0 %v1068
    %1201 = vmatpush1.msra.mxu0 %v1067
    %1202 = vmatprep.subr.mxu0 %v1072
    %1203 = vmatpush1.msra.mxu0 %v1071
    %1204 = vmatprep.subr.mxu0 %v1076
    %1205 = vmatpush1.msra.mxu0 %v1075
    %1206 = vmatprep.subr.mxu0 %v1080
    %1207 = vmatpush1.msra.mxu0 %v1079
    %1208 = vmatprep.subr.mxu0 %v1084
    %1209 = vmatpush1.msra.mxu0 %v1083
    %1210 = vmatprep.subr.mxu0 %v1088
    %1211 = vmatpush1.msra.mxu0 %v1087
    %1212 = vmatprep.subr.mxu0 %v1092
    %1213 = vmatpush1.msra.mxu0 %v1091
    %1214 = vmatprep.subr.mxu0 %v1096
    %1215 = vmatpush1.msra.mxu0 %v1095
    %1216 = vmatprep.subr.mxu0 %v1100
    %1217 = vmatpush1.msra.mxu0 %v1099
    %1218 = vmatprep.subr.mxu0 %v1104
    %1219 = vmatpush1.msra.mxu0 %v1103
    %1220 = vmatprep.subr.mxu0 %v1108
    %1221 = vmatpush1.msra.mxu0 %v1107
    %1222 = vmatprep.subr.mxu0 %v1112
    %1223 = vmatpush1.msra.mxu0 %v1111
    %1224 = vmatprep.subr.mxu0 %v1116
    %1225 = vmatpush1.msra.mxu0 %v1115
    %1226 = vmatprep.subr.mxu0 %v1120
    %1227 = vmatpush1.msra.mxu0 %v1119
    %1228 = vmatprep.subr.mxu0 %v1124
    %1229 = vmatpush1.msra.mxu0 %v1123
    %1230 = vmatprep.subr.mxu0 %v1128
    %1231 = vmatpush1.msra.mxu0 %v1127
    %1232 = vmatprep.subr.mxu0 0.0
    %1233 = vmatpush1.msra.mxu0 0.0
    %1234 = vmatprep.subr.mxu0 0.0
    %1235 = vmatpush1.msra.mxu0 0.0
    %1236 = vmatprep.subr.mxu0 0.0
    %1237 = vmatpush1.msra.mxu0 0.0
    %1238 = vmatprep.subr.mxu0 0.0
    %1239 = vmatpush1.msra.mxu0 0.0
    %1240 = vmatprep.subr.mxu0 0.0
    %1241 = vmatpush1.msra.mxu0 0.0
    %1242 = vmatprep.subr.mxu0 0.0
    %1243 = vmatpush1.msra.mxu0 0.0
    %1244 = vmatprep.subr.mxu0 0.0
    %1245 = vmatpush1.msra.mxu0 0.0
    %1246 = vmatprep.subr.mxu0 0.0
    %1247 = vmatpush1.msra.mxu0 0.0
    %1248 = vmatprep.subr.mxu0 0.0
    %1249 = vmatpush1.msra.mxu0 0.0
    %1250 = vmatprep.subr.mxu0 0.0
    %1251 = vmatpush1.msra.mxu0 0.0
    %1252 = vmatprep.subr.mxu0 0.0
    %1253 = vmatpush1.msra.mxu0 0.0
    %1254 = vmatprep.subr.mxu0 0.0
    %1255 = vmatpush1.msra.mxu0 0.0
    %1256 = vmatprep.subr.mxu0 0.0
    %1257 = vmatpush1.msra.mxu0 0.0
    %1258 = vmatprep.subr.mxu0 0.0
    %1259 = vmatpush1.msra.mxu0 0.0
    %1260 = vmatprep.subr.mxu0 0.0
    %1261 = vmatpush1.msra.mxu0 0.0
    %1262 = vmatprep.subr.mxu0 0.0
    %1263 = vmatpush1.msra.mxu0 0.0
    %1264 = vmatprep.mubr.f32.mxu0 0.0
    %1265 = vmatmul.mubr.f32.gmra.mrb[0].mxu0 %v1058
    %v1266 = vpop.f32.mrb[0].mxu0
    %v1267 = vadd.f32 0.0, %v1266
    %v1268 = vpop.f32.mrb[0].mxu0
    %v1269 = vadd.f32 0.0, %v1268
    %1270 = vdwg.mxu0
    %v1271 = vadd.f32 %v1061, %v1196
    %v1272 = vadd.f32 %v1062, %v1198
    %v1273 = vadd.f32 %v1063, %v1267
    %v1274 = vadd.f32 %v1064, %v1269
    %v1275 = vxor.u32 %v1271, 2147483648
    %v1276 = vmul.f32 %v1275, 1.442695
    %v1277 = vpow.pop %v1276
    %v1278 = vadd.f32 %v1277, 1.0
    %v1279 = vrcp.pop %v1278
    %v1280 = vmul.f32 1.0, %v1279
    %v1281 = vxor.u32 %v1272, 2147483648
    %v1282 = vmul.f32 %v1281, 1.442695
    %v1283 = vpow.pop %v1282
    %v1284 = vadd.f32 %v1283, 1.0
    %v1285 = vrcp.pop %v1284
    %v1286 = vmul.f32 1.0, %v1285
    %v1287 = vtanh.pop %v1273
    %v1288 = vxor.u32 %v1274, 2147483648
    %v1289 = vmul.f32 %v1288, 1.442695
    %v1290 = vpow.pop %v1289
    %v1291 = vadd.f32 %v1290, 1.0
    %v1292 = vrcp.pop %v1291
    %v1293 = vmul.f32 1.0, %v1292
    %v1294 = vmul.f32 %v1286, %v1059
    %v1295 = vmul.f32 %v1280, %v1287
    %v1296 = vadd.f32 %v1294, %v1295
    %v1297 = vtanh.pop %v1296
    %v1298 = vmul.f32 %v1293, %v1297
    %1299 = vst [vmem:[#allocation2] sm:$0xff] %v1298
    %1300 = vst [vmem:[#allocation3] sm:$0xff] %v1296
    %s1301 = scalar_lea.vmem [#allocation12], 32
    %1302 = vst [vmem:[%s1301] sm:$0xff] %v1298
    %v1303 = vld [vmem:[#allocation2] sm:$0xff]
    %v1304 = vld [vmem:[#allocation3] sm:$0xff]
    %s1305 = scalar_lea.vmem [#allocation4], 160
    %v1306 = vld [vmem:[%s1305] sm:$0xff]
    %v1307 = vld [vmem:[%s1305 + $0x8] sm:$0xff]
    %v1308 = vld [vmem:[%s1305 + $0x10] sm:$0xff]
    %v1309 = vld [vmem:[%s1305 + $0x18] sm:$0xff]
    %v1310 = vld [vmem:[#allocation10] sm:$0xff]
    %v1311 = vld [vmem:[#allocation10 + $0x8] sm:$0xff]
    %v1312 = vld [vmem:[#allocation10 + $0x10] sm:$0xff]
    %v1313 = vld [vmem:[#allocation10 + $0x18] sm:$0xff]
    %v1314 = vld [vmem:[#allocation10 + $0x20] sm:$0xff]
    %v1315 = vld [vmem:[#allocation10 + $0x28] sm:$0xff]
    %v1316 = vld [vmem:[#allocation10 + $0x30] sm:$0xff]
    %v1317 = vld [vmem:[#allocation10 + $0x38] sm:$0xff]
    %v1318 = vld [vmem:[#allocation10 + $0x40] sm:$0xff]
    %v1319 = vld [vmem:[#allocation10 + $0x48] sm:$0xff]
    %v1320 = vld [vmem:[#allocation10 + $0x50] sm:$0xff]
    %v1321 = vld [vmem:[#allocation10 + $0x58] sm:$0xff]
    %v1322 = vld [vmem:[#allocation10 + $0x60] sm:$0xff]
    %v1323 = vld [vmem:[#allocation10 + $0x68] sm:$0xff]
    %v1324 = vld [vmem:[#allocation10 + $0x70] sm:$0xff]
    %v1325 = vld [vmem:[#allocation10 + $0x78] sm:$0xff]
    %v1326 = vld [vmem:[#allocation10 + $0x80] sm:$0xff]
    %v1327 = vld [vmem:[#allocation10 + $0x88] sm:$0xff]
    %v1328 = vld [vmem:[#allocation10 + $0x90] sm:$0xff]
    %v1329 = vld [vmem:[#allocation10 + $0x98] sm:$0xff]
    %v1330 = vld [vmem:[#allocation10 + $0xa0] sm:$0xff]
    %v1331 = vld [vmem:[#allocation10 + $0xa8] sm:$0xff]
    %v1332 = vld [vmem:[#allocation10 + $0xb0] sm:$0xff]
    %v1333 = vld [vmem:[#allocation10 + $0xb8] sm:$0xff]
    %v1334 = vld [vmem:[#allocation10 + $0xc0] sm:$0xff]
    %v1335 = vld [vmem:[#allocation10 + $0xc8] sm:$0xff]
    %v1336 = vld [vmem:[#allocation10 + $0xd0] sm:$0xff]
    %v1337 = vld [vmem:[#allocation10 + $0xd8] sm:$0xff]
    %v1338 = vld [vmem:[#allocation10 + $0xe0] sm:$0xff]
    %v1339 = vld [vmem:[#allocation10 + $0xe8] sm:$0xff]
    %v1340 = vld [vmem:[#allocation10 + $0xf0] sm:$0xff]
    %v1341 = vld [vmem:[#allocation10 + $0xf8] sm:$0xff]
    %v1342 = vld [vmem:[#allocation10 + $0x100] sm:$0xff]
    %v1343 = vld [vmem:[#allocation10 + $0x108] sm:$0xff]
    %v1344 = vld [vmem:[#allocation10 + $0x110] sm:$0xff]
    %v1345 = vld [vmem:[#allocation10 + $0x118] sm:$0xff]
    %v1346 = vld [vmem:[#allocation10 + $0x120] sm:$0xff]
    %v1347 = vld [vmem:[#allocation10 + $0x128] sm:$0xff]
    %v1348 = vld [vmem:[#allocation10 + $0x130] sm:$0xff]
    %v1349 = vld [vmem:[#allocation10 + $0x138] sm:$0xff]
    %v1350 = vld [vmem:[#allocation10 + $0x140] sm:$0xff]
    %v1351 = vld [vmem:[#allocation10 + $0x148] sm:$0xff]
    %v1352 = vld [vmem:[#allocation10 + $0x150] sm:$0xff]
    %v1353 = vld [vmem:[#allocation10 + $0x158] sm:$0xff]
    %v1354 = vld [vmem:[#allocation10 + $0x160] sm:$0xff]
    %v1355 = vld [vmem:[#allocation10 + $0x168] sm:$0xff]
    %v1356 = vld [vmem:[#allocation10 + $0x170] sm:$0xff]
    %v1357 = vld [vmem:[#allocation10 + $0x178] sm:$0xff]
    %v1358 = vld [vmem:[#allocation10 + $0x180] sm:$0xff]
    %v1359 = vld [vmem:[#allocation10 + $0x188] sm:$0xff]
    %v1360 = vld [vmem:[#allocation10 + $0x190] sm:$0xff]
    %v1361 = vld [vmem:[#allocation10 + $0x198] sm:$0xff]
    %v1362 = vld [vmem:[#allocation10 + $0x1a0] sm:$0xff]
    %v1363 = vld [vmem:[#allocation10 + $0x1a8] sm:$0xff]
    %v1364 = vld [vmem:[#allocation10 + $0x1b0] sm:$0xff]
    %v1365 = vld [vmem:[#allocation10 + $0x1b8] sm:$0xff]
    %v1366 = vld [vmem:[#allocation10 + $0x1c0] sm:$0xff]
    %v1367 = vld [vmem:[#allocation10 + $0x1c8] sm:$0xff]
    %v1368 = vld [vmem:[#allocation10 + $0x1d0] sm:$0xff]
    %v1369 = vld [vmem:[#allocation10 + $0x1d8] sm:$0xff]
    %v1370 = vld [vmem:[#allocation10 + $0x1e0] sm:$0xff]
    %v1371 = vld [vmem:[#allocation10 + $0x1e8] sm:$0xff]
    %v1372 = vld [vmem:[#allocation10 + $0x1f0] sm:$0xff]
    %v1373 = vld [vmem:[#allocation10 + $0x1f8] sm:$0xff]
    %1374 = vmatprep.subr.mxu0 %v1311
    %1375 = vmatpush1.msra.mxu0 %v1310
    %1376 = vmatprep.subr.mxu0 %v1315
    %1377 = vmatpush1.msra.mxu0 %v1314
    %1378 = vmatprep.subr.mxu0 %v1319
    %1379 = vmatpush1.msra.mxu0 %v1318
    %1380 = vmatprep.subr.mxu0 %v1323
    %1381 = vmatpush1.msra.mxu0 %v1322
    %1382 = vmatprep.subr.mxu0 %v1327
    %1383 = vmatpush1.msra.mxu0 %v1326
    %1384 = vmatprep.subr.mxu0 %v1331
    %1385 = vmatpush1.msra.mxu0 %v1330
    %1386 = vmatprep.subr.mxu0 %v1335
    %1387 = vmatpush1.msra.mxu0 %v1334
    %1388 = vmatprep.subr.mxu0 %v1339
    %1389 = vmatpush1.msra.mxu0 %v1338
    %1390 = vmatprep.subr.mxu0 %v1343
    %1391 = vmatpush1.msra.mxu0 %v1342
    %1392 = vmatprep.subr.mxu0 %v1347
    %1393 = vmatpush1.msra.mxu0 %v1346
    %1394 = vmatprep.subr.mxu0 %v1351
    %1395 = vmatpush1.msra.mxu0 %v1350
    %1396 = vmatprep.subr.mxu0 %v1355
    %1397 = vmatpush1.msra.mxu0 %v1354
    %1398 = vmatprep.subr.mxu0 %v1359
    %1399 = vmatpush1.msra.mxu0 %v1358
    %1400 = vmatprep.subr.mxu0 %v1363
    %1401 = vmatpush1.msra.mxu0 %v1362
    %1402 = vmatprep.subr.mxu0 %v1367
    %1403 = vmatpush1.msra.mxu0 %v1366
    %1404 = vmatprep.subr.mxu0 %v1371
    %1405 = vmatpush1.msra.mxu0 %v1370
    %1406 = vmatprep.subr.mxu0 0.0
    %1407 = vmatpush1.msra.mxu0 0.0
    %1408 = vmatprep.subr.mxu0 0.0
    %1409 = vmatpush1.msra.mxu0 0.0
    %1410 = vmatprep.subr.mxu0 0.0
    %1411 = vmatpush1.msra.mxu0 0.0
    %1412 = vmatprep.subr.mxu0 0.0
    %1413 = vmatpush1.msra.mxu0 0.0
    %1414 = vmatprep.subr.mxu0 0.0
    %1415 = vmatpush1.msra.mxu0 0.0
    %1416 = vmatprep.subr.mxu0 0.0
    %1417 = vmatpush1.msra.mxu0 0.0
    %1418 = vmatprep.subr.mxu0 0.0
    %1419 = vmatpush1.msra.mxu0 0.0
    %1420 = vmatprep.subr.mxu0 0.0
    %1421 = vmatpush1.msra.mxu0 0.0
    %1422 = vmatprep.subr.mxu0 0.0
    %1423 = vmatpush1.msra.mxu0 0.0
    %1424 = vmatprep.subr.mxu0 0.0
    %1425 = vmatpush1.msra.mxu0 0.0
    %1426 = vmatprep.subr.mxu0 0.0
    %1427 = vmatpush1.msra.mxu0 0.0
    %1428 = vmatprep.subr.mxu0 0.0
    %1429 = vmatpush1.msra.mxu0 0.0
    %1430 = vmatprep.subr.mxu0 0.0
    %1431 = vmatpush1.msra.mxu0 0.0
    %1432 = vmatprep.subr.mxu0 0.0
    %1433 = vmatpush1.msra.mxu0 0.0
    %1434 = vmatprep.subr.mxu0 0.0
    %1435 = vmatpush1.msra.mxu0 0.0
    %1436 = vmatprep.subr.mxu0 0.0
    %1437 = vmatpush1.msra.mxu0 0.0
    %1438 = vmatprep.mubr.f32.mxu0 0.0
    %1439 = vmatmul.mubr.f32.gmra.mrb[0].mxu0 %v1303
    %v1440 = vpop.f32.mrb[0].mxu0
    %v1441 = vadd.f32 0.0, %v1440
    %v1442 = vpop.f32.mrb[0].mxu0
    %v1443 = vadd.f32 0.0, %v1442
    %1444 = vdwg.mxu0
    %1445 = vmatprep.subr.mxu0 %v1313
    %1446 = vmatpush1.msra.mxu0 %v1312
    %1447 = vmatprep.subr.mxu0 %v1317
    %1448 = vmatpush1.msra.mxu0 %v1316
    %1449 = vmatprep.subr.mxu0 %v1321
    %1450 = vmatpush1.msra.mxu0 %v1320
    %1451 = vmatprep.subr.mxu0 %v1325
    %1452 = vmatpush1.msra.mxu0 %v1324
    %1453 = vmatprep.subr.mxu0 %v1329
    %1454 = vmatpush1.msra.mxu0 %v1328
    %1455 = vmatprep.subr.mxu0 %v1333
    %1456 = vmatpush1.msra.mxu0 %v1332
    %1457 = vmatprep.subr.mxu0 %v1337
    %1458 = vmatpush1.msra.mxu0 %v1336
    %1459 = vmatprep.subr.mxu0 %v1341
    %1460 = vmatpush1.msra.mxu0 %v1340
    %1461 = vmatprep.subr.mxu0 %v1345
    %1462 = vmatpush1.msra.mxu0 %v1344
    %1463 = vmatprep.subr.mxu0 %v1349
    %1464 = vmatpush1.msra.mxu0 %v1348
    %1465 = vmatprep.subr.mxu0 %v1353
    %1466 = vmatpush1.msra.mxu0 %v1352
    %1467 = vmatprep.subr.mxu0 %v1357
    %1468 = vmatpush1.msra.mxu0 %v1356
    %1469 = vmatprep.subr.mxu0 %v1361
    %1470 = vmatpush1.msra.mxu0 %v1360
    %1471 = vmatprep.subr.mxu0 %v1365
    %1472 = vmatpush1.msra.mxu0 %v1364
    %1473 = vmatprep.subr.mxu0 %v1369
    %1474 = vmatpush1.msra.mxu0 %v1368
    %1475 = vmatprep.subr.mxu0 %v1373
    %1476 = vmatpush1.msra.mxu0 %v1372
    %1477 = vmatprep.subr.mxu0 0.0
    %1478 = vmatpush1.msra.mxu0 0.0
    %1479 = vmatprep.subr.mxu0 0.0
    %1480 = vmatpush1.msra.mxu0 0.0
    %1481 = vmatprep.subr.mxu0 0.0
    %1482 = vmatpush1.msra.mxu0 0.0
    %1483 = vmatprep.subr.mxu0 0.0
    %1484 = vmatpush1.msra.mxu0 0.0
    %1485 = vmatprep.subr.mxu0 0.0
    %1486 = vmatpush1.msra.mxu0 0.0
    %1487 = vmatprep.subr.mxu0 0.0
    %1488 = vmatpush1.msra.mxu0 0.0
    %1489 = vmatprep.subr.mxu0 0.0
    %1490 = vmatpush1.msra.mxu0 0.0
    %1491 = vmatprep.subr.mxu0 0.0
    %1492 = vmatpush1.msra.mxu0 0.0
    %1493 = vmatprep.subr.mxu0 0.0
    %1494 = vmatpush1.msra.mxu0 0.0
    %1495 = vmatprep.subr.mxu0 0.0
    %1496 = vmatpush1.msra.mxu0 0.0
    %1497 = vmatprep.subr.mxu0 0.0
    %1498 = vmatpush1.msra.mxu0 0.0
    %1499 = vmatprep.subr.mxu0 0.0
    %1500 = vmatpush1.msra.mxu0 0.0
    %1501 = vmatprep.subr.mxu0 0.0
    %1502 = vmatpush1.msra.mxu0 0.0
    %1503 = vmatprep.subr.mxu0 0.0
    %1504 = vmatpush1.msra.mxu0 0.0
    %1505 = vmatprep.subr.mxu0 0.0
    %1506 = vmatpush1.msra.mxu0 0.0
    %1507 = vmatprep.subr.mxu0 0.0
    %1508 = vmatpush1.msra.mxu0 0.0
    %1509 = vmatprep.mubr.f32.mxu0 0.0
    %1510 = vmatmul.mubr.f32.gmra.mrb[0].mxu0 %v1303
    %v1511 = vpop.f32.mrb[0].mxu0
    %v1512 = vadd.f32 0.0, %v1511
    %v1513 = vpop.f32.mrb[0].mxu0
    %v1514 = vadd.f32 0.0, %v1513
    %1515 = vdwg.mxu0
    %v1516 = vadd.f32 %v1306, %v1441
    %v1517 = vadd.f32 %v1307, %v1443
    %v1518 = vadd.f32 %v1308, %v1512
    %v1519 = vadd.f32 %v1309, %v1514
    %v1520 = vxor.u32 %v1516, 2147483648
    %v1521 = vmul.f32 %v1520, 1.442695
    %v1522 = vpow.pop %v1521
    %v1523 = vadd.f32 %v1522, 1.0
    %v1524 = vrcp.pop %v1523
    %v1525 = vmul.f32 1.0, %v1524
    %v1526 = vxor.u32 %v1517, 2147483648
    %v1527 = vmul.f32 %v1526, 1.442695
    %v1528 = vpow.pop %v1527
    %v1529 = vadd.f32 %v1528, 1.0
    %v1530 = vrcp.pop %v1529
    %v1531 = vmul.f32 1.0, %v1530
    %v1532 = vtanh.pop %v1518
    %v1533 = vxor.u32 %v1519, 2147483648
    %v1534 = vmul.f32 %v1533, 1.442695
    %v1535 = vpow.pop %v1534
    %v1536 = vadd.f32 %v1535, 1.0
    %v1537 = vrcp.pop %v1536
    %v1538 = vmul.f32 1.0, %v1537
    %v1539 = vmul.f32 %v1531, %v1304
    %v1540 = vmul.f32 %v1525, %v1532
    %v1541 = vadd.f32 %v1539, %v1540
    %v1542 = vtanh.pop %v1541
    %v1543 = vmul.f32 %v1538, %v1542
    %1544 = vst [vmem:[#allocation2] sm:$0xff] %v1543
    %1545 = vst [vmem:[#allocation3] sm:$0xff] %v1541
    %s1546 = scalar_lea.vmem [#allocation12], 40
    %1547 = vst [vmem:[%s1546] sm:$0xff] %v1543
    %v1548 = vld [vmem:[#allocation2] sm:$0xff]
    %v1549 = vld [vmem:[#allocation3] sm:$0xff]
    %s1550 = scalar_lea.vmem [#allocation4], 192
    %v1551 = vld [vmem:[%s1550] sm:$0xff]
    %v1552 = vld [vmem:[%s1550 + $0x8] sm:$0xff]
    %v1553 = vld [vmem:[%s1550 + $0x10] sm:$0xff]
    %v1554 = vld [vmem:[%s1550 + $0x18] sm:$0xff]
    %v1555 = vld [vmem:[#allocation10] sm:$0xff]
    %v1556 = vld [vmem:[#allocation10 + $0x8] sm:$0xff]
    %v1557 = vld [vmem:[#allocation10 + $0x10] sm:$0xff]
    %v1558 = vld [vmem:[#allocation10 + $0x18] sm:$0xff]
    %v1559 = vld [vmem:[#allocation10 + $0x20] sm:$0xff]
    %v1560 = vld [vmem:[#allocation10 + $0x28] sm:$0xff]
    %v1561 = vld [vmem:[#allocation10 + $0x30] sm:$0xff]
    %v1562 = vld [vmem:[#allocation10 + $0x38] sm:$0xff]
    %v1563 = vld [vmem:[#allocation10 + $0x40] sm:$0xff]
    %v1564 = vld [vmem:[#allocation10 + $0x48] sm:$0xff]
    %v1565 = vld [vmem:[#allocation10 + $0x50] sm:$0xff]
    %v1566 = vld [vmem:[#allocation10 + $0x58] sm:$0xff]
    %v1567 = vld [vmem:[#allocation10 + $0x60] sm:$0xff]
    %v1568 = vld [vmem:[#allocation10 + $0x68] sm:$0xff]
    %v1569 = vld [vmem:[#allocation10 + $0x70] sm:$0xff]
    %v1570 = vld [vmem:[#allocation10 + $0x78] sm:$0xff]
    %v1571 = vld [vmem:[#allocation10 + $0x80] sm:$0xff]
    %v1572 = vld [vmem:[#allocation10 + $0x88] sm:$0xff]
    %v1573 = vld [vmem:[#allocation10 + $0x90] sm:$0xff]
    %v1574 = vld [vmem:[#allocation10 + $0x98] sm:$0xff]
    %v1575 = vld [vmem:[#allocation10 + $0xa0] sm:$0xff]
    %v1576 = vld [vmem:[#allocation10 + $0xa8] sm:$0xff]
    %v1577 = vld [vmem:[#allocation10 + $0xb0] sm:$0xff]
    %v1578 = vld [vmem:[#allocation10 + $0xb8] sm:$0xff]
    %v1579 = vld [vmem:[#allocation10 + $0xc0] sm:$0xff]
    %v1580 = vld [vmem:[#allocation10 + $0xc8] sm:$0xff]
    %v1581 = vld [vmem:[#allocation10 + $0xd0] sm:$0xff]
    %v1582 = vld [vmem:[#allocation10 + $0xd8] sm:$0xff]
    %v1583 = vld [vmem:[#allocation10 + $0xe0] sm:$0xff]
    %v1584 = vld [vmem:[#allocation10 + $0xe8] sm:$0xff]
    %v1585 = vld [vmem:[#allocation10 + $0xf0] sm:$0xff]
    %v1586 = vld [vmem:[#allocation10 + $0xf8] sm:$0xff]
    %v1587 = vld [vmem:[#allocation10 + $0x100] sm:$0xff]
    %v1588 = vld [vmem:[#allocation10 + $0x108] sm:$0xff]
    %v1589 = vld [vmem:[#allocation10 + $0x110] sm:$0xff]
    %v1590 = vld [vmem:[#allocation10 + $0x118] sm:$0xff]
    %v1591 = vld [vmem:[#allocation10 + $0x120] sm:$0xff]
    %v1592 = vld [vmem:[#allocation10 + $0x128] sm:$0xff]
    %v1593 = vld [vmem:[#allocation10 + $0x130] sm:$0xff]
    %v1594 = vld [vmem:[#allocation10 + $0x138] sm:$0xff]
    %v1595 = vld [vmem:[#allocation10 + $0x140] sm:$0xff]
    %v1596 = vld [vmem:[#allocation10 + $0x148] sm:$0xff]
    %v1597 = vld [vmem:[#allocation10 + $0x150] sm:$0xff]
    %v1598 = vld [vmem:[#allocation10 + $0x158] sm:$0xff]
    %v1599 = vld [vmem:[#allocation10 + $0x160] sm:$0xff]
    %v1600 = vld [vmem:[#allocation10 + $0x168] sm:$0xff]
    %v1601 = vld [vmem:[#allocation10 + $0x170] sm:$0xff]
    %v1602 = vld [vmem:[#allocation10 + $0x178] sm:$0xff]
    %v1603 = vld [vmem:[#allocation10 + $0x180] sm:$0xff]
    %v1604 = vld [vmem:[#allocation10 + $0x188] sm:$0xff]
    %v1605 = vld [vmem:[#allocation10 + $0x190] sm:$0xff]
    %v1606 = vld [vmem:[#allocation10 + $0x198] sm:$0xff]
    %v1607 = vld [vmem:[#allocation10 + $0x1a0] sm:$0xff]
    %v1608 = vld [vmem:[#allocation10 + $0x1a8] sm:$0xff]
    %v1609 = vld [vmem:[#allocation10 + $0x1b0] sm:$0xff]
    %v1610 = vld [vmem:[#allocation10 + $0x1b8] sm:$0xff]
    %v1611 = vld [vmem:[#allocation10 + $0x1c0] sm:$0xff]
    %v1612 = vld [vmem:[#allocation10 + $0x1c8] sm:$0xff]
    %v1613 = vld [vmem:[#allocation10 + $0x1d0] sm:$0xff]
    %v1614 = vld [vmem:[#allocation10 + $0x1d8] sm:$0xff]
    %v1615 = vld [vmem:[#allocation10 + $0x1e0] sm:$0xff]
    %v1616 = vld [vmem:[#allocation10 + $0x1e8] sm:$0xff]
    %v1617 = vld [vmem:[#allocation10 + $0x1f0] sm:$0xff]
    %v1618 = vld [vmem:[#allocation10 + $0x1f8] sm:$0xff]
    %1619 = vmatprep.subr.mxu0 %v1556
    %1620 = vmatpush1.msra.mxu0 %v1555
    %1621 = vmatprep.subr.mxu0 %v1560
    %1622 = vmatpush1.msra.mxu0 %v1559
    %1623 = vmatprep.subr.mxu0 %v1564
    %1624 = vmatpush1.msra.mxu0 %v1563
    %1625 = vmatprep.subr.mxu0 %v1568
    %1626 = vmatpush1.msra.mxu0 %v1567
    %1627 = vmatprep.subr.mxu0 %v1572
    %1628 = vmatpush1.msra.mxu0 %v1571
    %1629 = vmatprep.subr.mxu0 %v1576
    %1630 = vmatpush1.msra.mxu0 %v1575
    %1631 = vmatprep.subr.mxu0 %v1580
    %1632 = vmatpush1.msra.mxu0 %v1579
    %1633 = vmatprep.subr.mxu0 %v1584
    %1634 = vmatpush1.msra.mxu0 %v1583
    %1635 = vmatprep.subr.mxu0 %v1588
    %1636 = vmatpush1.msra.mxu0 %v1587
    %1637 = vmatprep.subr.mxu0 %v1592
    %1638 = vmatpush1.msra.mxu0 %v1591
    %1639 = vmatprep.subr.mxu0 %v1596
    %1640 = vmatpush1.msra.mxu0 %v1595
    %1641 = vmatprep.subr.mxu0 %v1600
    %1642 = vmatpush1.msra.mxu0 %v1599
    %1643 = vmatprep.subr.mxu0 %v1604
    %1644 = vmatpush1.msra.mxu0 %v1603
    %1645 = vmatprep.subr.mxu0 %v1608
    %1646 = vmatpush1.msra.mxu0 %v1607
    %1647 = vmatprep.subr.mxu0 %v1612
    %1648 = vmatpush1.msra.mxu0 %v1611
    %1649 = vmatprep.subr.mxu0 %v1616
    %1650 = vmatpush1.msra.mxu0 %v1615
    %1651 = vmatprep.subr.mxu0 0.0
    %1652 = vmatpush1.msra.mxu0 0.0
    %1653 = vmatprep.subr.mxu0 0.0
    %1654 = vmatpush1.msra.mxu0 0.0
    %1655 = vmatprep.subr.mxu0 0.0
    %1656 = vmatpush1.msra.mxu0 0.0
    %1657 = vmatprep.subr.mxu0 0.0
    %1658 = vmatpush1.msra.mxu0 0.0
    %1659 = vmatprep.subr.mxu0 0.0
    %1660 = vmatpush1.msra.mxu0 0.0
    %1661 = vmatprep.subr.mxu0 0.0
    %1662 = vmatpush1.msra.mxu0 0.0
    %1663 = vmatprep.subr.mxu0 0.0
    %1664 = vmatpush1.msra.mxu0 0.0
    %1665 = vmatprep.subr.mxu0 0.0
    %1666 = vmatpush1.msra.mxu0 0.0
    %1667 = vmatprep.subr.mxu0 0.0
    %1668 = vmatpush1.msra.mxu0 0.0
    %1669 = vmatprep.subr.mxu0 0.0
    %1670 = vmatpush1.msra.mxu0 0.0
    %1671 = vmatprep.subr.mxu0 0.0
    %1672 = vmatpush1.msra.mxu0 0.0
    %1673 = vmatprep.subr.mxu0 0.0
    %1674 = vmatpush1.msra.mxu0 0.0
    %1675 = vmatprep.subr.mxu0 0.0
    %1676 = vmatpush1.msra.mxu0 0.0
    %1677 = vmatprep.subr.mxu0 0.0
    %1678 = vmatpush1.msra.mxu0 0.0
    %1679 = vmatprep.subr.mxu0 0.0
    %1680 = vmatpush1.msra.mxu0 0.0
    %1681 = vmatprep.subr.mxu0 0.0
    %1682 = vmatpush1.msra.mxu0 0.0
    %1683 = vmatprep.mubr.f32.mxu0 0.0
    %1684 = vmatmul.mubr.f32.gmra.mrb[0].mxu0 %v1548
    %v1685 = vpop.f32.mrb[0].mxu0
    %v1686 = vadd.f32 0.0, %v1685
    %v1687 = vpop.f32.mrb[0].mxu0
    %v1688 = vadd.f32 0.0, %v1687
    %1689 = vdwg.mxu0
    %1690 = vmatprep.subr.mxu0 %v1558
    %1691 = vmatpush1.msra.mxu0 %v1557
    %1692 = vmatprep.subr.mxu0 %v1562
    %1693 = vmatpush1.msra.mxu0 %v1561
    %1694 = vmatprep.subr.mxu0 %v1566
    %1695 = vmatpush1.msra.mxu0 %v1565
    %1696 = vmatprep.subr.mxu0 %v1570
    %1697 = vmatpush1.msra.mxu0 %v1569
    %1698 = vmatprep.subr.mxu0 %v1574
    %1699 = vmatpush1.msra.mxu0 %v1573
    %1700 = vmatprep.subr.mxu0 %v1578
    %1701 = vmatpush1.msra.mxu0 %v1577
    %1702 = vmatprep.subr.mxu0 %v1582
    %1703 = vmatpush1.msra.mxu0 %v1581
    %1704 = vmatprep.subr.mxu0 %v1586
    %1705 = vmatpush1.msra.mxu0 %v1585
    %1706 = vmatprep.subr.mxu0 %v1590
    %1707 = vmatpush1.msra.mxu0 %v1589
    %1708 = vmatprep.subr.mxu0 %v1594
    %1709 = vmatpush1.msra.mxu0 %v1593
    %1710 = vmatprep.subr.mxu0 %v1598
    %1711 = vmatpush1.msra.mxu0 %v1597
    %1712 = vmatprep.subr.mxu0 %v1602
    %1713 = vmatpush1.msra.mxu0 %v1601
    %1714 = vmatprep.subr.mxu0 %v1606
    %1715 = vmatpush1.msra.mxu0 %v1605
    %1716 = vmatprep.subr.mxu0 %v1610
    %1717 = vmatpush1.msra.mxu0 %v1609
    %1718 = vmatprep.subr.mxu0 %v1614
    %1719 = vmatpush1.msra.mxu0 %v1613
    %1720 = vmatprep.subr.mxu0 %v1618
    %1721 = vmatpush1.msra.mxu0 %v1617
    %1722 = vmatprep.subr.mxu0 0.0
    %1723 = vmatpush1.msra.mxu0 0.0
    %1724 = vmatprep.subr.mxu0 0.0
    %1725 = vmatpush1.msra.mxu0 0.0
    %1726 = vmatprep.subr.mxu0 0.0
    %1727 = vmatpush1.msra.mxu0 0.0
    %1728 = vmatprep.subr.mxu0 0.0
    %1729 = vmatpush1.msra.mxu0 0.0
    %1730 = vmatprep.subr.mxu0 0.0
    %1731 = vmatpush1.msra.mxu0 0.0
    %1732 = vmatprep.subr.mxu0 0.0
    %1733 = vmatpush1.msra.mxu0 0.0
    %1734 = vmatprep.subr.mxu0 0.0
    %1735 = vmatpush1.msra.mxu0 0.0
    %1736 = vmatprep.subr.mxu0 0.0
    %1737 = vmatpush1.msra.mxu0 0.0
    %1738 = vmatprep.subr.mxu0 0.0
    %1739 = vmatpush1.msra.mxu0 0.0
    %1740 = vmatprep.subr.mxu0 0.0
    %1741 = vmatpush1.msra.mxu0 0.0
    %1742 = vmatprep.subr.mxu0 0.0
    %1743 = vmatpush1.msra.mxu0 0.0
    %1744 = vmatprep.subr.mxu0 0.0
    %1745 = vmatpush1.msra.mxu0 0.0
    %1746 = vmatprep.subr.mxu0 0.0
    %1747 = vmatpush1.msra.mxu0 0.0
    %1748 = vmatprep.subr.mxu0 0.0
    %1749 = vmatpush1.msra.mxu0 0.0
    %1750 = vmatprep.subr.mxu0 0.0
    %1751 = vmatpush1.msra.mxu0 0.0
    %1752 = vmatprep.subr.mxu0 0.0
    %1753 = vmatpush1.msra.mxu0 0.0
    %1754 = vmatprep.mubr.f32.mxu0 0.0
    %1755 = vmatmul.mubr.f32.gmra.mrb[0].mxu0 %v1548
    %v1756 = vpop.f32.mrb[0].mxu0
    %v1757 = vadd.f32 0.0, %v1756
    %v1758 = vpop.f32.mrb[0].mxu0
    %v1759 = vadd.f32 0.0, %v1758
    %1760 = vdwg.mxu0
    %v1761 = vadd.f32 %v1551, %v1686
    %v1762 = vadd.f32 %v1552, %v1688
    %v1763 = vadd.f32 %v1553, %v1757
    %v1764 = vadd.f32 %v1554, %v1759
    %v1765 = vxor.u32 %v1761, 2147483648
    %v1766 = vmul.f32 %v1765, 1.442695
    %v1767 = vpow.pop %v1766
    %v1768 = vadd.f32 %v1767, 1.0
    %v1769 = vrcp.pop %v1768
    %v1770 = vmul.f32 1.0, %v1769
    %v1771 = vxor.u32 %v1762, 2147483648
    %v1772 = vmul.f32 %v1771, 1.442695
    %v1773 = vpow.pop %v1772
    %v1774 = vadd.f32 %v1773, 1.0
    %v1775 = vrcp.pop %v1774
    %v1776 = vmul.f32 1.0, %v1775
    %v1777 = vtanh.pop %v1763
    %v1778 = vxor.u32 %v1764, 2147483648
    %v1779 = vmul.f32 %v1778, 1.442695
    %v1780 = vpow.pop %v1779
    %v1781 = vadd.f32 %v1780, 1.0
    %v1782 = vrcp.pop %v1781
    %v1783 = vmul.f32 1.0, %v1782
    %v1784 = vmul.f32 %v1776, %v1549
    %v1785 = vmul.f32 %v1770, %v1777
    %v1786 = vadd.f32 %v1784, %v1785
    %v1787 = vtanh.pop %v1786
    %v1788 = vmul.f32 %v1783, %v1787
    %1789 = vst [vmem:[#allocation2] sm:$0xff] %v1788
    %1790 = vst [vmem:[#allocation3] sm:$0xff] %v1786
    %s1791 = scalar_lea.vmem [#allocation12], 48
    %1792 = vst [vmem:[%s1791] sm:$0xff] %v1788
    %v1793 = vld [vmem:[#allocation2] sm:$0xff]
    %v1794 = vld [vmem:[#allocation3] sm:$0xff]
    %s1795 = scalar_lea.vmem [#allocation4], 224
    %v1796 = vld [vmem:[%s1795] sm:$0xff]
    %v1797 = vld [vmem:[%s1795 + $0x8] sm:$0xff]
    %v1798 = vld [vmem:[%s1795 + $0x10] sm:$0xff]
    %v1799 = vld [vmem:[%s1795 + $0x18] sm:$0xff]
    %v1800 = vld [vmem:[#allocation10] sm:$0xff]
    %v1801 = vld [vmem:[#allocation10 + $0x8] sm:$0xff]
    %v1802 = vld [vmem:[#allocation10 + $0x10] sm:$0xff]
    %v1803 = vld [vmem:[#allocation10 + $0x18] sm:$0xff]
    %v1804 = vld [vmem:[#allocation10 + $0x20] sm:$0xff]
    %v1805 = vld [vmem:[#allocation10 + $0x28] sm:$0xff]
    %v1806 = vld [vmem:[#allocation10 + $0x30] sm:$0xff]
    %v1807 = vld [vmem:[#allocation10 + $0x38] sm:$0xff]
    %v1808 = vld [vmem:[#allocation10 + $0x40] sm:$0xff]
    %v1809 = vld [vmem:[#allocation10 + $0x48] sm:$0xff]
    %v1810 = vld [vmem:[#allocation10 + $0x50] sm:$0xff]
    %v1811 = vld [vmem:[#allocation10 + $0x58] sm:$0xff]
    %v1812 = vld [vmem:[#allocation10 + $0x60] sm:$0xff]
    %v1813 = vld [vmem:[#allocation10 + $0x68] sm:$0xff]
    %v1814 = vld [vmem:[#allocation10 + $0x70] sm:$0xff]
    %v1815 = vld [vmem:[#allocation10 + $0x78] sm:$0xff]
    %v1816 = vld [vmem:[#allocation10 + $0x80] sm:$0xff]
    %v1817 = vld [vmem:[#allocation10 + $0x88] sm:$0xff]
    %v1818 = vld [vmem:[#allocation10 + $0x90] sm:$0xff]
    %v1819 = vld [vmem:[#allocation10 + $0x98] sm:$0xff]
    %v1820 = vld [vmem:[#allocation10 + $0xa0] sm:$0xff]
    %v1821 = vld [vmem:[#allocation10 + $0xa8] sm:$0xff]
    %v1822 = vld [vmem:[#allocation10 + $0xb0] sm:$0xff]
    %v1823 = vld [vmem:[#allocation10 + $0xb8] sm:$0xff]
    %v1824 = vld [vmem:[#allocation10 + $0xc0] sm:$0xff]
    %v1825 = vld [vmem:[#allocation10 + $0xc8] sm:$0xff]
    %v1826 = vld [vmem:[#allocation10 + $0xd0] sm:$0xff]
    %v1827 = vld [vmem:[#allocation10 + $0xd8] sm:$0xff]
    %v1828 = vld [vmem:[#allocation10 + $0xe0] sm:$0xff]
    %v1829 = vld [vmem:[#allocation10 + $0xe8] sm:$0xff]
    %v1830 = vld [vmem:[#allocation10 + $0xf0] sm:$0xff]
    %v1831 = vld [vmem:[#allocation10 + $0xf8] sm:$0xff]
    %v1832 = vld [vmem:[#allocation10 + $0x100] sm:$0xff]
    %v1833 = vld [vmem:[#allocation10 + $0x108] sm:$0xff]
    %v1834 = vld [vmem:[#allocation10 + $0x110] sm:$0xff]
    %v1835 = vld [vmem:[#allocation10 + $0x118] sm:$0xff]
    %v1836 = vld [vmem:[#allocation10 + $0x120] sm:$0xff]
    %v1837 = vld [vmem:[#allocation10 + $0x128] sm:$0xff]
    %v1838 = vld [vmem:[#allocation10 + $0x130] sm:$0xff]
    %v1839 = vld [vmem:[#allocation10 + $0x138] sm:$0xff]
    %v1840 = vld [vmem:[#allocation10 + $0x140] sm:$0xff]
    %v1841 = vld [vmem:[#allocation10 + $0x148] sm:$0xff]
    %v1842 = vld [vmem:[#allocation10 + $0x150] sm:$0xff]
    %v1843 = vld [vmem:[#allocation10 + $0x158] sm:$0xff]
    %v1844 = vld [vmem:[#allocation10 + $0x160] sm:$0xff]
    %v1845 = vld [vmem:[#allocation10 + $0x168] sm:$0xff]
    %v1846 = vld [vmem:[#allocation10 + $0x170] sm:$0xff]
    %v1847 = vld [vmem:[#allocation10 + $0x178] sm:$0xff]
    %v1848 = vld [vmem:[#allocation10 + $0x180] sm:$0xff]
    %v1849 = vld [vmem:[#allocation10 + $0x188] sm:$0xff]
    %v1850 = vld [vmem:[#allocation10 + $0x190] sm:$0xff]
    %v1851 = vld [vmem:[#allocation10 + $0x198] sm:$0xff]
    %v1852 = vld [vmem:[#allocation10 + $0x1a0] sm:$0xff]
    %v1853 = vld [vmem:[#allocation10 + $0x1a8] sm:$0xff]
    %v1854 = vld [vmem:[#allocation10 + $0x1b0] sm:$0xff]
    %v1855 = vld [vmem:[#allocation10 + $0x1b8] sm:$0xff]
    %v1856 = vld [vmem:[#allocation10 + $0x1c0] sm:$0xff]
    %v1857 = vld [vmem:[#allocation10 + $0x1c8] sm:$0xff]
    %v1858 = vld [vmem:[#allocation10 + $0x1d0] sm:$0xff]
    %v1859 = vld [vmem:[#allocation10 + $0x1d8] sm:$0xff]
    %v1860 = vld [vmem:[#allocation10 + $0x1e0] sm:$0xff]
    %v1861 = vld [vmem:[#allocation10 + $0x1e8] sm:$0xff]
    %v1862 = vld [vmem:[#allocation10 + $0x1f0] sm:$0xff]
    %v1863 = vld [vmem:[#allocation10 + $0x1f8] sm:$0xff]
    %1864 = vmatprep.subr.mxu0 %v1801
    %1865 = vmatpush1.msra.mxu0 %v1800
    %1866 = vmatprep.subr.mxu0 %v1805
    %1867 = vmatpush1.msra.mxu0 %v1804
    %1868 = vmatprep.subr.mxu0 %v1809
    %1869 = vmatpush1.msra.mxu0 %v1808
    %1870 = vmatprep.subr.mxu0 %v1813
    %1871 = vmatpush1.msra.mxu0 %v1812
    %1872 = vmatprep.subr.mxu0 %v1817
    %1873 = vmatpush1.msra.mxu0 %v1816
    %1874 = vmatprep.subr.mxu0 %v1821
    %1875 = vmatpush1.msra.mxu0 %v1820
    %1876 = vmatprep.subr.mxu0 %v1825
    %1877 = vmatpush1.msra.mxu0 %v1824
    %1878 = vmatprep.subr.mxu0 %v1829
    %1879 = vmatpush1.msra.mxu0 %v1828
    %1880 = vmatprep.subr.mxu0 %v1833
    %1881 = vmatpush1.msra.mxu0 %v1832
    %1882 = vmatprep.subr.mxu0 %v1837
    %1883 = vmatpush1.msra.mxu0 %v1836
    %1884 = vmatprep.subr.mxu0 %v1841
    %1885 = vmatpush1.msra.mxu0 %v1840
    %1886 = vmatprep.subr.mxu0 %v1845
    %1887 = vmatpush1.msra.mxu0 %v1844
    %1888 = vmatprep.subr.mxu0 %v1849
    %1889 = vmatpush1.msra.mxu0 %v1848
    %1890 = vmatprep.subr.mxu0 %v1853
    %1891 = vmatpush1.msra.mxu0 %v1852
    %1892 = vmatprep.subr.mxu0 %v1857
    %1893 = vmatpush1.msra.mxu0 %v1856
    %1894 = vmatprep.subr.mxu0 %v1861
    %1895 = vmatpush1.msra.mxu0 %v1860
    %1896 = vmatprep.subr.mxu0 0.0
    %1897 = vmatpush1.msra.mxu0 0.0
    %1898 = vmatprep.subr.mxu0 0.0
    %1899 = vmatpush1.msra.mxu0 0.0
    %1900 = vmatprep.subr.mxu0 0.0
    %1901 = vmatpush1.msra.mxu0 0.0
    %1902 = vmatprep.subr.mxu0 0.0
    %1903 = vmatpush1.msra.mxu0 0.0
    %1904 = vmatprep.subr.mxu0 0.0
    %1905 = vmatpush1.msra.mxu0 0.0
    %1906 = vmatprep.subr.mxu0 0.0
    %1907 = vmatpush1.msra.mxu0 0.0
    %1908 = vmatprep.subr.mxu0 0.0
    %1909 = vmatpush1.msra.mxu0 0.0
    %1910 = vmatprep.subr.mxu0 0.0
    %1911 = vmatpush1.msra.mxu0 0.0
    %1912 = vmatprep.subr.mxu0 0.0
    %1913 = vmatpush1.msra.mxu0 0.0
    %1914 = vmatprep.subr.mxu0 0.0
    %1915 = vmatpush1.msra.mxu0 0.0
    %1916 = vmatprep.subr.mxu0 0.0
    %1917 = vmatpush1.msra.mxu0 0.0
    %1918 = vmatprep.subr.mxu0 0.0
    %1919 = vmatpush1.msra.mxu0 0.0
    %1920 = vmatprep.subr.mxu0 0.0
    %1921 = vmatpush1.msra.mxu0 0.0
    %1922 = vmatprep.subr.mxu0 0.0
    %1923 = vmatpush1.msra.mxu0 0.0
    %1924 = vmatprep.subr.mxu0 0.0
    %1925 = vmatpush1.msra.mxu0 0.0
    %1926 = vmatprep.subr.mxu0 0.0
    %1927 = vmatpush1.msra.mxu0 0.0
    %1928 = vmatprep.mubr.f32.mxu0 0.0
    %1929 = vmatmul.mubr.f32.gmra.mrb[0].mxu0 %v1793
    %v1930 = vpop.f32.mrb[0].mxu0
    %v1931 = vadd.f32 0.0, %v1930
    %v1932 = vpop.f32.mrb[0].mxu0
    %v1933 = vadd.f32 0.0, %v1932
    %1934 = vdwg.mxu0
    %1935 = vmatprep.subr.mxu0 %v1803
    %1936 = vmatpush1.msra.mxu0 %v1802
    %1937 = vmatprep.subr.mxu0 %v1807
    %1938 = vmatpush1.msra.mxu0 %v1806
    %1939 = vmatprep.subr.mxu0 %v1811
    %1940 = vmatpush1.msra.mxu0 %v1810
    %1941 = vmatprep.subr.mxu0 %v1815
    %1942 = vmatpush1.msra.mxu0 %v1814
    %1943 = vmatprep.subr.mxu0 %v1819
    %1944 = vmatpush1.msra.mxu0 %v1818
    %1945 = vmatprep.subr.mxu0 %v1823
    %1946 = vmatpush1.msra.mxu0 %v1822
    %1947 = vmatprep.subr.mxu0 %v1827
    %1948 = vmatpush1.msra.mxu0 %v1826
    %1949 = vmatprep.subr.mxu0 %v1831
    %1950 = vmatpush1.msra.mxu0 %v1830
    %1951 = vmatprep.subr.mxu0 %v1835
    %1952 = vmatpush1.msra.mxu0 %v1834
    %1953 = vmatprep.subr.mxu0 %v1839
    %1954 = vmatpush1.msra.mxu0 %v1838
    %1955 = vmatprep.subr.mxu0 %v1843
    %1956 = vmatpush1.msra.mxu0 %v1842
    %1957 = vmatprep.subr.mxu0 %v1847
    %1958 = vmatpush1.msra.mxu0 %v1846
    %1959 = vmatprep.subr.mxu0 %v1851
    %1960 = vmatpush1.msra.mxu0 %v1850
    %1961 = vmatprep.subr.mxu0 %v1855
    %1962 = vmatpush1.msra.mxu0 %v1854
    %1963 = vmatprep.subr.mxu0 %v1859
    %1964 = vmatpush1.msra.mxu0 %v1858
    %1965 = vmatprep.subr.mxu0 %v1863
    %1966 = vmatpush1.msra.mxu0 %v1862
    %1967 = vmatprep.subr.mxu0 0.0
    %1968 = vmatpush1.msra.mxu0 0.0
    %1969 = vmatprep.subr.mxu0 0.0
    %1970 = vmatpush1.msra.mxu0 0.0
    %1971 = vmatprep.subr.mxu0 0.0
    %1972 = vmatpush1.msra.mxu0 0.0
    %1973 = vmatprep.subr.mxu0 0.0
    %1974 = vmatpush1.msra.mxu0 0.0
    %1975 = vmatprep.subr.mxu0 0.0
    %1976 = vmatpush1.msra.mxu0 0.0
    %1977 = vmatprep.subr.mxu0 0.0
    %1978 = vmatpush1.msra.mxu0 0.0
    %1979 = vmatprep.subr.mxu0 0.0
    %1980 = vmatpush1.msra.mxu0 0.0
    %1981 = vmatprep.subr.mxu0 0.0
    %1982 = vmatpush1.msra.mxu0 0.0
    %1983 = vmatprep.subr.mxu0 0.0
    %1984 = vmatpush1.msra.mxu0 0.0
    %1985 = vmatprep.subr.mxu0 0.0
    %1986 = vmatpush1.msra.mxu0 0.0
    %1987 = vmatprep.subr.mxu0 0.0
    %1988 = vmatpush1.msra.mxu0 0.0
    %1989 = vmatprep.subr.mxu0 0.0
    %1990 = vmatpush1.msra.mxu0 0.0
    %1991 = vmatprep.subr.mxu0 0.0
    %1992 = vmatpush1.msra.mxu0 0.0
    %1993 = vmatprep.subr.mxu0 0.0
    %1994 = vmatpush1.msra.mxu0 0.0
    %1995 = vmatprep.subr.mxu0 0.0
    %1996 = vmatpush1.msra.mxu0 0.0
    %1997 = vmatprep.subr.mxu0 0.0
    %1998 = vmatpush1.msra.mxu0 0.0
    %1999 = vmatprep.mubr.f32.mxu0 0.0
    %2000 = vmatmul.mubr.f32.gmra.mrb[0].mxu0 %v1793
    %v2001 = vpop.f32.mrb[0].mxu0
    %v2002 = vadd.f32 0.0, %v2001
    %v2003 = vpop.f32.mrb[0].mxu0
    %v2004 = vadd.f32 0.0, %v2003
    %2005 = vdwg.mxu0
    %v2006 = vadd.f32 %v1796, %v1931
    %v2007 = vadd.f32 %v1797, %v1933
    %v2008 = vadd.f32 %v1798, %v2002
    %v2009 = vadd.f32 %v1799, %v2004
    %v2010 = vxor.u32 %v2006, 2147483648
    %v2011 = vmul.f32 %v2010, 1.442695
    %v2012 = vpow.pop %v2011
    %v2013 = vadd.f32 %v2012, 1.0
    %v2014 = vrcp.pop %v2013
    %v2015 = vmul.f32 1.0, %v2014
    %v2016 = vxor.u32 %v2007, 2147483648
    %v2017 = vmul.f32 %v2016, 1.442695
    %v2018 = vpow.pop %v2017
    %v2019 = vadd.f32 %v2018, 1.0
    %v2020 = vrcp.pop %v2019
    %v2021 = vmul.f32 1.0, %v2020
    %v2022 = vtanh.pop %v2008
    %v2023 = vxor.u32 %v2009, 2147483648
    %v2024 = vmul.f32 %v2023, 1.442695
    %v2025 = vpow.pop %v2024
    %v2026 = vadd.f32 %v2025, 1.0
    %v2027 = vrcp.pop %v2026
    %v2028 = vmul.f32 1.0, %v2027
    %v2029 = vmul.f32 %v2021, %v1794
    %v2030 = vmul.f32 %v2015, %v2022
    %v2031 = vadd.f32 %v2029, %v2030
    %v2032 = vtanh.pop %v2031
    %v2033 = vmul.f32 %v2028, %v2032
    %2034 = vst [vmem:[#allocation2] sm:$0xff] %v2033
    %2035 = vst [vmem:[#allocation3] sm:$0xff] %v2031
    %s2036 = scalar_lea.vmem [#allocation12], 56
    %2037 = vst [vmem:[%s2036] sm:$0xff] %v2033
    // Predicated region
    $region38: #{tpu_custom_call.1} parent=1 // pred_check
      %p2038 = pneg %p72
    $region39: #{tpu_custom_call.1} parent=1 // pred_check_branch
      %2040 = sbr.rel (%p2038) target = $region41
    $region40: #{tpu_custom_call.1} parent=1 // pred_region
      %v2041 = vld [vmem:[#allocation3] sm:$0xff]
      %2042 = vst [vmem:[#allocation13] sm:$0xff] %v2041
    $region41: #{tpu_custom_call.1} parent=1 // pred_fallthru
      _
    // Predicated region
    $region42: #{tpu_custom_call.1} parent=1 // pred_check
      _
    $region43: #{tpu_custom_call.1} parent=1 // pred_check_branch
      %2044 = sbr.rel (0) target = $region45
    $region44: #{tpu_custom_call.1} parent=1 // pred_region
      %s2046 = ssub.s32 1024, 1024
      %2047 = vsyncadd [#allocation6], %s2046
      %s2048 = sshll.u32 [#allocation12], 4
      %s2049 = int_to_ptr.vmem [resolvable:$true] %s2048
      %2054 = dma.vmem_to_hbm [thread:$0]  %s2049, 1024, %s4, [#allocation6], 128, 128, 8
    $region45: #{tpu_custom_call.1} parent=1 // pred_fallthru
      _
    // Predicated region
    $region46: #{tpu_custom_call.1} parent=1 // pred_check
      _
    $region47: #{tpu_custom_call.1} parent=1 // pred_check_branch
      %2056 = sbr.rel (0) target = $region49
    $region48: #{tpu_custom_call.1} parent=1 // pred_region
      %s2058 = ssub.s32 128, 128
      %2059 = vsyncadd [#allocation14], %s2058
      %s2061 = sshll.u32 [#allocation13], 4
      %s2062 = int_to_ptr.vmem [resolvable:$true] %s2061
      %2064 = dma.vmem_to_hbm [thread:$0]  %s2062, 128, %s5, [#allocation14]
    $region49: #{tpu_custom_call.1} parent=1 // pred_fallthru
      _
    // Predicated region
    $region50: #{tpu_custom_call.1} parent=1 // pred_check
      _
    $region51: #{tpu_custom_call.1} parent=1 // pred_check_branch
      %2066 = sbr.rel (0) target = $region53
    $region52: #{tpu_custom_call.1} parent=1 // pred_region
      %2067 = dma.done [#allocation6], 1024
    $region53: #{tpu_custom_call.1} parent=1 // pred_fallthru
      _
    // Predicated region
    $region54: #{tpu_custom_call.1} parent=1 // pred_check
      _
    $region55: #{tpu_custom_call.1} parent=1 // pred_check_branch
      %2069 = sbr.rel (0) target = $region57
    $region56: #{tpu_custom_call.1} parent=1 // pred_region
      %2070 = dma.done [#allocation14], 128
    $region57: #{tpu_custom_call.1} parent=1 // pred_fallthru
      _
    %2071 = vsyncpa [#allocation5], 1
    %2072 = vsyncpa [#allocation8], 1
    %2073 = vsyncpa [#allocation11], 1
    %2074 = vsyncpa [#allocation6], 1
    %2075 = vsyncpa [#allocation14], 1

</llo_original>
